<compile_context>
chip_gen: v7x
topology: tpu7x:2x2x1
jax: 0.10.0
libtpu: 0.0.40
codegen_flags: <defaults>
</compile_context>

<pallas_src>
import functools

import jax
import jax.numpy as jnp
from jax import lax
from jax.experimental import pallas as pl
from jax.experimental.pallas import tpu as pltpu


LN_EPS = 1e-5  # nn.LayerNorm default


def _round_up(a, m):
    return ((a + m - 1) // m) * m


def _gelu_exact(x):
    # nn.GELU() default == exact erf formulation
    return 0.5 * x * (1.0 + lax.erf(x * 0.7071067811865476))


def _layernorm(x, gamma, beta):
    # two-pass (centered) variance: robust to catastrophic cancellation.
    mean = jnp.mean(x, axis=-1, keepdims=True)
    xc = x - mean
    var = jnp.mean(xc * xc, axis=-1, keepdims=True)
    return xc * lax.rsqrt(var + LN_EPS) * gamma + beta


def encoder_kernel(x_ref, w1_ref, w2_ref, w5_ref, vec_ref, out_ref, *,
                   h1, h2, zdim, pack):
    # Packed parameter slab, loaded once per grid step and sliced statically.
    vecs = vec_ref[...]                      # (8, maxw) f32
    b1, g1, be1 = vecs[0:1, :h1], vecs[1:2, :h1], vecs[2:3, :h1]
    b2, g2, be2 = vecs[3:4, :h2], vecs[4:5, :h2], vecs[5:6, :h2]
    tw = 2 * zdim
    b5 = vecs[6:7, :tw]

    x = x_ref[...]                           # bf16 (cast in the wrapper)

    # body1: Linear + LayerNorm + GELU  (bf16 matmul, f32 accumulate, f32 norm/act)
    h = jnp.dot(x, w1_ref[...], preferred_element_type=jnp.float32) + b1
    h = _gelu_exact(_layernorm(h, g1, be1))

    # body2: Linear + LayerNorm + GELU
    h = jnp.dot(h.astype(w2_ref.dtype), w2_ref[...],
                preferred_element_type=jnp.float32) + b2
    h = _gelu_exact(_layernorm(h, g2, be2))

    # body5: single fused Linear -> [mu | sigma]
    s = jnp.dot(h.astype(w5_ref.dtype), w5_ref[...],
                preferred_element_type=jnp.float32) + b5   # (bm, tw)

    # Lane-dense fold: concatenate `pack` contiguous sublane chunks along the lane
    # axis -> (bm/pack, pack*tw) with pack*tw a multiple of 128 (unmasked stores).
    bm = s.shape[0]
    bm_p = bm // pack
    s_packed = jnp.concatenate(
        [s[j * bm_p:(j + 1) * bm_p, :] for j in range(pack)], axis=-1)

    # exp only on the sigma half; guard the argument so mu logits never hit exp.
    col = lax.broadcasted_iota(jnp.int32, s_packed.shape, dimension=1)
    is_mu = (col % tw) < zdim
    out = jnp.where(is_mu, s_packed, jnp.exp(jnp.where(is_mu, 0.0, s_packed)))
    out_ref[...] = out.astype(out_ref.dtype)


def encoder_forward(x, params, zdim, *, bm=512):
    """params: pytorch-convention Linear weights (out,in) + LN gamma/beta."""
    B, D = x.shape
    tw = 2 * zdim

    # Lane-dense packing factor: fold `pack` batch rows per output row so the packed
    # row width is a multiple of 128 lanes (pack=4 for zdim=16).
    pack = 1
    for p in (8, 4, 2):
        if (p * tw) % 128 == 0:
            pack = p
            break

    # Batch tile: multiple of 16 (bf16 sublanes) and of 8*pack (output block rows).
    # No jnp.pad of x: grid = cdiv(B, bm), Pallas handles the ragged last tile.
    align = max(16, 8 * pack)
    bm = min(_round_up(max(bm, align), align), _round_up(B, align))
    half = _round_up(pl.cdiv(B, 2), align)
    if B > align and half < bm:
        bm = half            # keep >= 2 grid steps so v7x can use both TensorCores
    grid = pl.cdiv(B, bm)
    bm_p = bm // pack

    # Weights: (out,in) -> (in,out), bf16 for the MXU.
    w1 = params["w1"].T.astype(jnp.bfloat16)        # (D,  h1)
    w2 = params["w2"].T.astype(jnp.bfloat16)        # (h1, h2)
    w5 = params["w5"].T.astype(jnp.bfloat16)        # (h2, 2*zdim)
    h1, h2 = w1.shape[1], w2.shape[1]

    # Pack the small per-layer vectors into one f32 slab (8 rows, max width)
    # -> 5 input DMAs instead of 13.
    maxw = max(h1, h2, tw)

    def row(v):
        return jnp.pad(v.astype(jnp.float32), (0, maxw - v.shape[0]))

    vec_slab = jnp.stack([
        row(params["b1"]), row(params["g1"]), row(params["be1"]),
        row(params["b2"]), row(params["g2"]), row(params["be2"]),
        row(params["b5"]), jnp.zeros((maxw,), jnp.float32),
    ])                                               # (8, maxw)

    x_bf = x.astype(jnp.bfloat16)

    full = lambda shape: pl.BlockSpec(shape, lambda i: (0, 0))
    # TODO(synk): for large h1/h2 set pipeline_mode=pl.Buffered(1) on the weight
    # specs (grid-invariant index_map) and tile their output dim.

    grid_spec = pltpu.PrefetchScalarGridSpec(
        num_scalar_prefetch=0,
        grid=(grid,),
        in_specs=[
            pl.BlockSpec((bm, D), lambda i: (i, 0)),     # x: tiled over batch (ragged ok)
            full(w1.shape), full(w2.shape), full(w5.shape),
            full(vec_slab.shape),
        ],
        # output covers grid*bm rows exactly -> every store is full-block, unmasked.
        out_specs=pl.BlockSpec((bm_p, pack * tw), lambda i: (i, 0)),
    )

    out_packed = pl.pallas_call(
        functools.partial(encoder_kernel, h1=h1, h2=h2, zdim=zdim, pack=pack),
        out_shape=jax.ShapeDtypeStruct((grid * bm_p, pack * tw), jnp.float32),
        grid_spec=grid_spec,
        compiler_params=pltpu.CompilerParams(
            dimension_semantics=("parallel",),
            vmem_limit_bytes=32 * 1024 * 1024),
    )(x_bf, w1, w2, w5, vec_slab)

    # Un-fold the per-tile lane packing (tiny array; cheap XLA reshape/transpose),
    # drop the pad rows from the ragged last tile.
    out = (out_packed.reshape(grid, bm_p, pack, tw)
                     .transpose(0, 2, 1, 3)
                     .reshape(grid * bm, tw))[:B]
    return out[:, :zdim], out[:, zdim:]


def init_params(key, input_size, h1, h2, zdim):
    """Deterministic synthetic parameters (shapes follow the module's __init__)."""
    ks = jax.random.split(key, 6)
    s = 0.1
    return {
        # body1: Linear(input_size, arch[0][0]=h1), LayerNorm(h1)
        "w1": jax.random.normal(ks[0], (h1, input_size), jnp.float32) * s,
        "b1": jax.random.normal(ks[1], (h1,), jnp.float32) * s,
        "g1": jnp.ones((h1,), jnp.float32),
        "be1": jnp.zeros((h1,), jnp.float32),
        # body2: Linear(h1, h2), LayerNorm(h2)
        "w2": jax.random.normal(ks[2], (h2, h1), jnp.float32) * s,
        "b2": jax.random.normal(ks[3], (h2,), jnp.float32) * s,
        "g2": jnp.ones((h2,), jnp.float32),
        "be2": jnp.zeros((h2,), jnp.float32),
        # body5: Linear(h2, zdim*2)  (bNorm[4]=0, relu[4]=0, drop[4]=0)
        "w5": jax.random.normal(ks[4], (2 * zdim, h2), jnp.float32) * s,
        "b5": jax.random.normal(ks[5], (2 * zdim,), jnp.float32) * s,
    }


if __name__ == "__main__":
    # Config implied by the module:
    #   arch = [[32], [32, 32], ..., [32, zdim*2]], bNorm = [32, 32, 0, 0, 0],
    #   relu = [1, 1, 0, 0, 0], dropout = [0, 0, 0, 0, 0]
    # batch=200 is deliberately NOT a multiple of the tile: exercises the ragged
    # last tile (grid=cdiv) plus the lane-dense packed output path.
    batch, input_size, hidden, zdim = 200, 32, 32, 16

    key = jax.random.PRNGKey(0)
    kx, kp = jax.random.split(key)
    x = jax.random.normal(kx, (batch, input_size), jnp.float32)
    params = init_params(kp, input_size, hidden, hidden, zdim)

    mu, std = encoder_forward(x, params, zdim)
    jax.block_until_ready((mu, std))

    # Reference 1: same precision as the kernel (bf16 matmuls, f32 accumulate) — tight check.
    def ref_bf16(x, p):
        bdot = lambda a, w: jnp.dot(a.astype(jnp.bfloat16), w.T.astype(jnp.bfloat16),
                                    preferred_element_type=jnp.float32)
        h = bdot(x, p["w1"]) + p["b1"]
        h = (h - h.mean(-1, keepdims=True)) * lax.rsqrt(h.var(-1, keepdims=True) + LN_EPS) * p["g1"] + p["be1"]
        h = jax.nn.gelu(h, approximate=False)
        h = bdot(h, p["w2"]) + p["b2"]
        h = (h - h.mean(-1, keepdims=True)) * lax.rsqrt(h.var(-1, keepdims=True) + LN_EPS) * p["g2"] + p["be2"]
        h = jax.nn.gelu(h, approximate=False)
        s = bdot(h, p["w5"]) + p["b5"]
        return s[:, :zdim], jnp.exp(s[:, zdim:])

    # Reference 2: full-f32 module semantics — loose check (bf16 matmul precision).
    def ref_f32(x, p):
        h = x @ p["w1"].T + p["b1"]
        h = (h - h.mean(-1, keepdims=True)) * lax.rsqrt(h.var(-1, keepdims=True) + LN_EPS) * p["g1"] + p["be1"]
        h = jax.nn.gelu(h, approximate=False)
        h = h @ p["w2"].T + p["b2"]
        h = (h - h.mean(-1, keepdims=True)) * lax.rsqrt(h.var(-1, keepdims=True) + LN_EPS) * p["g2"] + p["be2"]
        h = jax.nn.gelu(h, approximate=False)
        s = h @ p["w5"].T + p["b5"]
        return s[:, :zdim], jnp.exp(s[:, zdim:])

    mu_b, std_b = ref_bf16(x, params)
    assert jnp.allclose(mu, mu_b, atol=2e-3, rtol=2e-3)
    assert jnp.allclose(std, std_b, atol=2e-3, rtol=2e-3)

    mu_r, std_r = ref_f32(x, params)
    assert jnp.allclose(mu, mu_r, atol=1e-1, rtol=1e-1)
    assert jnp.allclose(std, std_r, atol=1e-1, rtol=1e-1)

    print("KERNEL_OK")
</pallas_src>

<mosaic_0001>
module attributes {stable_mosaic.version = 11 : i64} {
  func.func @encoder_kernel(%arg0: i32, %arg1: memref<128x32xbf16, #tpu.memory_space<vmem>>, %arg2: memref<32x32xbf16, #tpu.memory_space<vmem>>, %arg3: memref<32x32xbf16, #tpu.memory_space<vmem>>, %arg4: memref<32x32xbf16, #tpu.memory_space<vmem>>, %arg5: memref<8x32xf32, #tpu.memory_space<vmem>>, %arg6: memref<16x256xf32, #tpu.memory_space<vmem>>) attributes {dimension_semantics = [#tpu.dimension_semantics<parallel>], iteration_bounds = array<i64: 2>, scalar_prefetch = 0 : i64, scratch_operands = 0 : i64, tpu.core_type = #tpu.core_type<tc>, window_params = [{transform_indices = @transform_0, window_bounds = array<i64: 128, 32>}, {pipeline_mode = #tpu.pipeline_mode<synchronous>, transform_indices = @transform_1, window_bounds = array<i64: 32, 32>}, {pipeline_mode = #tpu.pipeline_mode<synchronous>, transform_indices = @transform_2, window_bounds = array<i64: 32, 32>}, {pipeline_mode = #tpu.pipeline_mode<synchronous>, transform_indices = @transform_3, window_bounds = array<i64: 32, 32>}, {pipeline_mode = #tpu.pipeline_mode<synchronous>, transform_indices = @transform_4, window_bounds = array<i64: 8, 32>}, {transform_indices = @transform_5, window_bounds = array<i64: 16, 256>}]} {
    %c0 = arith.constant 0 : index
    %c0_0 = arith.constant 0 : index
    %0 = vector.load %arg5[%c0, %c0_0] : memref<8x32xf32, #tpu.memory_space<vmem>>, vector<8x32xf32>
    %1 = vector.extract_strided_slice %0 {offsets = [0, 0], sizes = [1, 32], strides = [1, 1]} : vector<8x32xf32> to vector<1x32xf32>
    %2 = vector.extract_strided_slice %0 {offsets = [1, 0], sizes = [1, 32], strides = [1, 1]} : vector<8x32xf32> to vector<1x32xf32>
    %3 = vector.extract_strided_slice %0 {offsets = [2, 0], sizes = [1, 32], strides = [1, 1]} : vector<8x32xf32> to vector<1x32xf32>
    %4 = vector.extract_strided_slice %0 {offsets = [3, 0], sizes = [1, 32], strides = [1, 1]} : vector<8x32xf32> to vector<1x32xf32>
    %5 = vector.extract_strided_slice %0 {offsets = [4, 0], sizes = [1, 32], strides = [1, 1]} : vector<8x32xf32> to vector<1x32xf32>
    %6 = vector.extract_strided_slice %0 {offsets = [5, 0], sizes = [1, 32], strides = [1, 1]} : vector<8x32xf32> to vector<1x32xf32>
    %7 = vector.extract_strided_slice %0 {offsets = [6, 0], sizes = [1, 32], strides = [1, 1]} : vector<8x32xf32> to vector<1x32xf32>
    %c0_1 = arith.constant 0 : index
    %c0_2 = arith.constant 0 : index
    %8 = vector.load %arg1[%c0_1, %c0_2] : memref<128x32xbf16, #tpu.memory_space<vmem>>, vector<128x32xbf16>
    %c0_3 = arith.constant 0 : index
    %c0_4 = arith.constant 0 : index
    %9 = vector.load %arg2[%c0_3, %c0_4] : memref<32x32xbf16, #tpu.memory_space<vmem>>, vector<32x32xbf16>
    %cst = arith.constant dense<0.000000e+00> : vector<128x32xf32>
    %10 = tpu.matmul %8, %9, %cst {dimension_numbers = #tpu.dot_dimension_numbers<[1], [0], [0], [1], [0, 0, 1, 1], [], []>} : vector<128x32xbf16>, vector<32x32xbf16>, vector<128x32xf32> -> vector<128x32xf32>
    %11 = vector.broadcast %1 : vector<1x32xf32> to vector<128x32xf32>
    %12 = arith.addf %10, %11 : vector<128x32xf32>
    %cst_5 = arith.constant dense<0.000000e+00> : vector<128xf32>
    %13 = vector.multi_reduction <add>, %12, %cst_5 [1] : vector<128x32xf32> to vector<128xf32>
    %14 = vector.shape_cast %13 : vector<128xf32> to vector<128x1xf32>
    %cst_6 = arith.constant 3.200000e+01 : f32
    %15 = vector.broadcast %cst_6 : f32 to vector<128x1xf32>
    %16 = arith.divf %14, %15 : vector<128x1xf32>
    %17 = vector.broadcast %16 : vector<128x1xf32> to vector<128x32xf32>
    %18 = arith.subf %12, %17 : vector<128x32xf32>
    %19 = arith.mulf %18, %18 : vector<128x32xf32>
    %cst_7 = arith.constant dense<0.000000e+00> : vector<128xf32>
    %20 = vector.multi_reduction <add>, %19, %cst_7 [1] : vector<128x32xf32> to vector<128xf32>
    %21 = vector.shape_cast %20 : vector<128xf32> to vector<128x1xf32>
    %cst_8 = arith.constant 3.200000e+01 : f32
    %22 = vector.broadcast %cst_8 : f32 to vector<128x1xf32>
    %23 = arith.divf %21, %22 : vector<128x1xf32>
    %cst_9 = arith.constant 9.99999974E-6 : f32
    %24 = vector.broadcast %cst_9 : f32 to vector<128x1xf32>
    %25 = arith.addf %23, %24 : vector<128x1xf32>
    %26 = math.rsqrt %25 : vector<128x1xf32>
    %27 = vector.broadcast %26 : vector<128x1xf32> to vector<128x32xf32>
    %28 = arith.mulf %18, %27 : vector<128x32xf32>
    %29 = vector.broadcast %2 : vector<1x32xf32> to vector<128x32xf32>
    %30 = arith.mulf %28, %29 : vector<128x32xf32>
    %31 = vector.broadcast %3 : vector<1x32xf32> to vector<128x32xf32>
    %32 = arith.addf %30, %31 : vector<128x32xf32>
    %cst_10 = arith.constant 5.000000e-01 : f32
    %33 = vector.broadcast %cst_10 : f32 to vector<128x32xf32>
    %34 = arith.mulf %33, %32 : vector<128x32xf32>
    %cst_11 = arith.constant 0.707106769 : f32
    %35 = vector.broadcast %cst_11 : f32 to vector<128x32xf32>
    %36 = arith.mulf %32, %35 : vector<128x32xf32>
    %37 = math.erf %36 : vector<128x32xf32>
    %cst_12 = arith.constant 1.000000e+00 : f32
    %38 = vector.broadcast %cst_12 : f32 to vector<128x32xf32>
    %39 = arith.addf %38, %37 : vector<128x32xf32>
    %40 = arith.mulf %34, %39 : vector<128x32xf32>
    %41 = arith.truncf %40 : vector<128x32xf32> to vector<128x32xbf16>
    %c0_13 = arith.constant 0 : index
    %c0_14 = arith.constant 0 : index
    %42 = vector.load %arg3[%c0_13, %c0_14] : memref<32x32xbf16, #tpu.memory_space<vmem>>, vector<32x32xbf16>
    %cst_15 = arith.constant dense<0.000000e+00> : vector<128x32xf32>
    %43 = tpu.matmul %41, %42, %cst_15 {dimension_numbers = #tpu.dot_dimension_numbers<[1], [0], [0], [1], [0, 0, 1, 1], [], []>} : vector<128x32xbf16>, vector<32x32xbf16>, vector<128x32xf32> -> vector<128x32xf32>
    %44 = vector.broadcast %4 : vector<1x32xf32> to vector<128x32xf32>
    %45 = arith.addf %43, %44 : vector<128x32xf32>
    %cst_16 = arith.constant dense<0.000000e+00> : vector<128xf32>
    %46 = vector.multi_reduction <add>, %45, %cst_16 [1] : vector<128x32xf32> to vector<128xf32>
    %47 = vector.shape_cast %46 : vector<128xf32> to vector<128x1xf32>
    %cst_17 = arith.constant 3.200000e+01 : f32
    %48 = vector.broadcast %cst_17 : f32 to vector<128x1xf32>
    %49 = arith.divf %47, %48 : vector<128x1xf32>
    %50 = vector.broadcast %49 : vector<128x1xf32> to vector<128x32xf32>
    %51 = arith.subf %45, %50 : vector<128x32xf32>
    %52 = arith.mulf %51, %51 : vector<128x32xf32>
    %cst_18 = arith.constant dense<0.000000e+00> : vector<128xf32>
    %53 = vector.multi_reduction <add>, %52, %cst_18 [1] : vector<128x32xf32> to vector<128xf32>
    %54 = vector.shape_cast %53 : vector<128xf32> to vector<128x1xf32>
    %cst_19 = arith.constant 3.200000e+01 : f32
    %55 = vector.broadcast %cst_19 : f32 to vector<128x1xf32>
    %56 = arith.divf %54, %55 : vector<128x1xf32>
    %cst_20 = arith.constant 9.99999974E-6 : f32
    %57 = vector.broadcast %cst_20 : f32 to vector<128x1xf32>
    %58 = arith.addf %56, %57 : vector<128x1xf32>
    %59 = math.rsqrt %58 : vector<128x1xf32>
    %60 = vector.broadcast %59 : vector<128x1xf32> to vector<128x32xf32>
    %61 = arith.mulf %51, %60 : vector<128x32xf32>
    %62 = vector.broadcast %5 : vector<1x32xf32> to vector<128x32xf32>
    %63 = arith.mulf %61, %62 : vector<128x32xf32>
    %64 = vector.broadcast %6 : vector<1x32xf32> to vector<128x32xf32>
    %65 = arith.addf %63, %64 : vector<128x32xf32>
    %cst_21 = arith.constant 5.000000e-01 : f32
    %66 = vector.broadcast %cst_21 : f32 to vector<128x32xf32>
    %67 = arith.mulf %66, %65 : vector<128x32xf32>
    %cst_22 = arith.constant 0.707106769 : f32
    %68 = vector.broadcast %cst_22 : f32 to vector<128x32xf32>
    %69 = arith.mulf %65, %68 : vector<128x32xf32>
    %70 = math.erf %69 : vector<128x32xf32>
    %cst_23 = arith.constant 1.000000e+00 : f32
    %71 = vector.broadcast %cst_23 : f32 to vector<128x32xf32>
    %72 = arith.addf %71, %70 : vector<128x32xf32>
    %73 = arith.mulf %67, %72 : vector<128x32xf32>
    %74 = arith.truncf %73 : vector<128x32xf32> to vector<128x32xbf16>
    %c0_24 = arith.constant 0 : index
    %c0_25 = arith.constant 0 : index
    %75 = vector.load %arg4[%c0_24, %c0_25] : memref<32x32xbf16, #tpu.memory_space<vmem>>, vector<32x32xbf16>
    %cst_26 = arith.constant dense<0.000000e+00> : vector<128x32xf32>
    %76 = tpu.matmul %74, %75, %cst_26 {dimension_numbers = #tpu.dot_dimension_numbers<[1], [0], [0], [1], [0, 0, 1, 1], [], []>} : vector<128x32xbf16>, vector<32x32xbf16>, vector<128x32xf32> -> vector<128x32xf32>
    %77 = vector.broadcast %7 : vector<1x32xf32> to vector<128x32xf32>
    %78 = arith.addf %76, %77 : vector<128x32xf32>
    %79 = vector.extract_strided_slice %78 {offsets = [0, 0], sizes = [16, 32], strides = [1, 1]} : vector<128x32xf32> to vector<16x32xf32>
    %80 = vector.extract_strided_slice %78 {offsets = [16, 0], sizes = [16, 32], strides = [1, 1]} : vector<128x32xf32> to vector<16x32xf32>
    %81 = vector.extract_strided_slice %78 {offsets = [32, 0], sizes = [16, 32], strides = [1, 1]} : vector<128x32xf32> to vector<16x32xf32>
    %82 = vector.extract_strided_slice %78 {offsets = [48, 0], sizes = [16, 32], strides = [1, 1]} : vector<128x32xf32> to vector<16x32xf32>
    %83 = vector.extract_strided_slice %78 {offsets = [64, 0], sizes = [16, 32], strides = [1, 1]} : vector<128x32xf32> to vector<16x32xf32>
    %84 = vector.extract_strided_slice %78 {offsets = [80, 0], sizes = [16, 32], strides = [1, 1]} : vector<128x32xf32> to vector<16x32xf32>
    %85 = vector.extract_strided_slice %78 {offsets = [96, 0], sizes = [16, 32], strides = [1, 1]} : vector<128x32xf32> to vector<16x32xf32>
    %86 = vector.extract_strided_slice %78 {offsets = [112, 0], sizes = [16, 32], strides = [1, 1]} : vector<128x32xf32> to vector<16x32xf32>
    %87 = tpu.concatenate %79, %80, %81, %82, %83, %84, %85, %86 in 1 : vector<16x32xf32>, vector<16x32xf32>, vector<16x32xf32>, vector<16x32xf32>, vector<16x32xf32>, vector<16x32xf32>, vector<16x32xf32>, vector<16x32xf32> -> vector<16x256xf32>
    %88 = tpu.iota {dimensions = array<i32: 1>} : vector<16x256xi32>
    %c32_i32 = arith.constant 32 : i32
    %c0_i32 = arith.constant 0 : i32
    %89 = arith.cmpi eq, %c32_i32, %c0_i32 : i32
    %c1_i32 = arith.constant 1 : i32
    %90 = arith.select %89, %c1_i32, %c32_i32 : i32
    %91 = vector.broadcast %90 : i32 to vector<16x256xi32>
    %92 = arith.remsi %88, %91 : vector<16x256xi32>
    %c0_i32_27 = arith.constant 0 : i32
    %93 = vector.broadcast %c0_i32_27 : i32 to vector<16x256xi32>
    %94 = arith.cmpi ne, %92, %93 : vector<16x256xi32>
    %c0_i32_28 = arith.constant 0 : i32
    %95 = vector.broadcast %c0_i32_28 : i32 to vector<16x256xi32>
    %96 = arith.cmpi slt, %92, %95 : vector<16x256xi32>
    %c0_i32_29 = arith.constant 0 : i32
    %97 = arith.cmpi slt, %90, %c0_i32_29 : i32
    %98 = vector.broadcast %97 : i1 to vector<16x256xi1>
    %99 = vector.broadcast %98 : vector<16x256xi1> to vector<16x256xi1>
    %100 = arith.xori %96, %99 : vector<16x256xi1>
    %101 = arith.andi %100, %94 : vector<16x256xi1>
    %102 = vector.broadcast %90 : i32 to vector<16x256xi32>
    %103 = arith.addi %92, %102 : vector<16x256xi32>
    %104 = arith.select %101, %103, %92 : vector<16x256xi1>, vector<16x256xi32>
    %c16_i32 = arith.constant 16 : i32
    %105 = vector.broadcast %c16_i32 : i32 to vector<16x256xi32>
    %106 = arith.cmpi slt, %104, %105 : vector<16x256xi32>
    %cst_30 = arith.constant 0.000000e+00 : f32
    %107 = vector.broadcast %cst_30 : f32 to vector<16x256xf32>
    %108 = arith.select %106, %107, %87 : vector<16x256xi1>, vector<16x256xf32>
    %109 = math.exp %108 : vector<16x256xf32>
    %110 = arith.select %106, %87, %109 : vector<16x256xi1>, vector<16x256xf32>
    %c0_31 = arith.constant 0 : index
    %c0_32 = arith.constant 0 : index
    %111 = vector.load %arg6[%c0_31, %c0_32] : memref<16x256xf32, #tpu.memory_space<vmem>>, vector<16x256xf32>
    tpu.vector_store %arg6[%c0_31, %c0_32], %110 {strides = array<i32>} : memref<16x256xf32, #tpu.memory_space<vmem>>, vector<16x256xf32>,
    return
  }
  func.func @transform_0(%arg0: i32) -> (i32, i32) {
    %c0_i32 = arith.constant 0 : i32
    %c0_i32_0 = arith.constant 0 : i32
    return %arg0, %c0_i32 : i32, i32
  }
  func.func @transform_1(%arg0: i32) -> (i32, i32) {
    %c0_i32 = arith.constant 0 : i32
    %c0_i32_0 = arith.constant 0 : i32
    %c0_i32_1 = arith.constant 0 : i32
    return %c0_i32, %c0_i32_0 : i32, i32
  }
  func.func @transform_2(%arg0: i32) -> (i32, i32) {
    %c0_i32 = arith.constant 0 : i32
    %c0_i32_0 = arith.constant 0 : i32
    %c0_i32_1 = arith.constant 0 : i32
    return %c0_i32, %c0_i32_0 : i32, i32
  }
  func.func @transform_3(%arg0: i32) -> (i32, i32) {
    %c0_i32 = arith.constant 0 : i32
    %c0_i32_0 = arith.constant 0 : i32
    %c0_i32_1 = arith.constant 0 : i32
    return %c0_i32, %c0_i32_0 : i32, i32
  }
  func.func @transform_4(%arg0: i32) -> (i32, i32) {
    %c0_i32 = arith.constant 0 : i32
    %c0_i32_0 = arith.constant 0 : i32
    %c0_i32_1 = arith.constant 0 : i32
    return %c0_i32, %c0_i32_0 : i32, i32
  }
  func.func @transform_5(%arg0: i32) -> (i32, i32) {
    %c0_i32 = arith.constant 0 : i32
    %c0_i32_0 = arith.constant 0 : i32
    return %arg0, %c0_i32 : i32, i32
  }
}

</mosaic_0001>

<llo_original>
// kernel: tpu_custom_call.1
$region0: #{tpu_custom_call.1}
  #allocation0 [shape = 'u32[]', space=smem, size = 0x4, offset = 0x4, fixed_abs, tag = 'smem constant byte address 0x4 - core index']
  #allocation1 [shape = 'u32[144,128]{1,0:T(1,128)}', space=vmem, size = 0x12000, scoped, tag = 'internal scratch']
  %s0 = inlined_call_operand.vmem [shape: bf16[200,32], index: 0, kind: input, shape index: {}]
  %s1 = inlined_call_operand.vmem [shape: bf16[32,32], index: 1, kind: input, shape index: {}]
  %s2 = inlined_call_operand.vmem [shape: bf16[32,32], index: 2, kind: input, shape index: {}]
  %s3 = inlined_call_operand.vmem [shape: bf16[32,32], index: 3, kind: input, shape index: {}]
  %s4 = inlined_call_operand.vmem [shape: f32[8,32], index: 4, kind: input, shape index: {}]
  %s5 = inlined_call_operand.hbm [shape: f32[32,256], index: 5, kind: output, shape index: {}]
  %s6 = sld [smem:[#allocation0]]
  $region53: #{tpu_custom_call.1} parent=0
    _
  %s8 = ssub.s32 1, %s6
  %s9 = scalar_select 0, %s8, %s6
  $region1: #{tpu_custom_call.1} parent=0
    #allocation2 [shape = 'u8[32768]{0}', space=vmem, size = 0x8000, scoped, tag = 'output window, operand 0']
    #allocation3 [shape = 's32[2]{0}', space=sflag, size = 0x8, scoped, tag = 'scoped memory for tpu_custom_call.1']
    %10 = vsyncpa [#allocation3], 0
    %s11 = scalar_lea.sflag [#allocation3], 1
    %12 = vsyncpa %s11, 0
    loop: start=0, step=1, limit=4
    $region2: #{tpu_custom_call.1} parent=1 // loop_pre_header
      _
    $region3: #{tpu_custom_call.1} parent=1 // loop_header
      %s14 = sphi 0, %s18
      %p15 = scmp.ge.s32.totalorder %s14, 4
      %s24 = sphi 0, %s26
      %s27 = sphi 0, %s24
      %s28 = sphi 0, %s27
      %s44 = sphi 0, %s28
      %s48 = sphi 0, %s48
      %s50 = sphi 0, %s48
      %s51 = sphi 0, %s50
      %s65 = sphi 0, %s51
      %s69 = sphi 0, %s69
      %s71 = sphi 0, %s69
      %s72 = sphi 0, %s71
      %s86 = sphi 0, %s72
      %s90 = sphi 0, %s90
      %s92 = sphi 0, %s90
      %s93 = sphi 0, %s92
      %s107 = sphi 0, %s93
      %s111 = sphi 0, %s111
      %s113 = sphi 0, %s111
      %s114 = sphi 0, %s113
      %s128 = sphi 0, %s114
      %s134 = sphi 0, %s136
      %s137 = sphi 0, %s134
      %s138 = sphi 0, %s137
      %s154 = sphi 0, %s138
    $region4: #{tpu_custom_call.1} parent=1 // loop_header_branch
      %17 = sbr.rel (%p15) target = $region8
    $region5: #{tpu_custom_call.1} parent=1 // loop_body
      %s19 = ssub.s32 %s14, 1
      %s20 = ssub.s32 %s14, 2
      %s21 = sadd.s32 %s14, 1
      %s22 = ssub.s32 %s14, %s21
      %p23 = scmp.eq.s32.totalorder %s22, 0
      %s25 = sadd.s32 %s24, 1
      %s26 = scalar_select %p23, %s24, %s25
      %p29 = pneg %p23
      %p30 = scmp.eq.s32.totalorder %s14, 1
      %p31 = por %p29, %p30
      %p32 = scmp.ne.s32.totalorder %s24, %s27
      %p33 = scmp.eq.s32.totalorder %s14, 0
      %p34 = por %p32, %p33
      %p35 = scmp.ne.s32.totalorder %s24, %s27
      %p36 = scmp.eq.s32.totalorder %s19, 1
      %p37 = por %p35, %p36
      %p38 = scmp.ne.s32.totalorder %s27, %s28
      %p39 = scmp.eq.s32.totalorder %s19, 0
      %p40 = por %p38, %p39
      %p41 = scmp.ne.s32.totalorder %s27, %s28
      %p42 = scmp.eq.s32.totalorder %s20, 1
      %p43 = por %p41, %p42
      %p45 = scmp.ne.s32.totalorder %s28, %s44
      %p46 = scmp.eq.s32.totalorder %s20, 0
      %p47 = por %p45, %p46
      %s49 = sadd.s32 %s48, 1
      %p52 = scmp.eq.s32.totalorder %s14, 1
      %p53 = scmp.ne.s32.totalorder %s48, %s50
      %p54 = scmp.eq.s32.totalorder %s14, 0
      %p55 = por %p53, %p54
      %p56 = scmp.ne.s32.totalorder %s48, %s50
      %p57 = scmp.eq.s32.totalorder %s19, 1
      %p58 = por %p56, %p57
      %p59 = scmp.ne.s32.totalorder %s50, %s51
      %p60 = scmp.eq.s32.totalorder %s19, 0
      %p61 = por %p59, %p60
      %p62 = scmp.ne.s32.totalorder %s50, %s51
      %p63 = scmp.eq.s32.totalorder %s20, 1
      %p64 = por %p62, %p63
      %p66 = scmp.ne.s32.totalorder %s51, %s65
      %p67 = scmp.eq.s32.totalorder %s20, 0
      %p68 = por %p66, %p67
      %s70 = sadd.s32 %s69, 1
      %p73 = scmp.eq.s32.totalorder %s14, 1
      %p74 = scmp.ne.s32.totalorder %s69, %s71
      %p75 = scmp.eq.s32.totalorder %s14, 0
      %p76 = por %p74, %p75
      %p77 = scmp.ne.s32.totalorder %s69, %s71
      %p78 = scmp.eq.s32.totalorder %s19, 1
      %p79 = por %p77, %p78
      %p80 = scmp.ne.s32.totalorder %s71, %s72
      %p81 = scmp.eq.s32.totalorder %s19, 0
      %p82 = por %p80, %p81
      %p83 = scmp.ne.s32.totalorder %s71, %s72
      %p84 = scmp.eq.s32.totalorder %s20, 1
      %p85 = por %p83, %p84
      %p87 = scmp.ne.s32.totalorder %s72, %s86
      %p88 = scmp.eq.s32.totalorder %s20, 0
      %p89 = por %p87, %p88
      %s91 = sadd.s32 %s90, 1
      %p94 = scmp.eq.s32.totalorder %s14, 1
      %p95 = scmp.ne.s32.totalorder %s90, %s92
      %p96 = scmp.eq.s32.totalorder %s14, 0
      %p97 = por %p95, %p96
      %p98 = scmp.ne.s32.totalorder %s90, %s92
      %p99 = scmp.eq.s32.totalorder %s19, 1
      %p100 = por %p98, %p99
      %p101 = scmp.ne.s32.totalorder %s92, %s93
      %p102 = scmp.eq.s32.totalorder %s19, 0
      %p103 = por %p101, %p102
      %p104 = scmp.ne.s32.totalorder %s92, %s93
      %p105 = scmp.eq.s32.totalorder %s20, 1
      %p106 = por %p104, %p105
      %p108 = scmp.ne.s32.totalorder %s93, %s107
      %p109 = scmp.eq.s32.totalorder %s20, 0
      %p110 = por %p108, %p109
      %s112 = sadd.s32 %s111, 1
      %p115 = scmp.eq.s32.totalorder %s14, 1
      %p116 = scmp.ne.s32.totalorder %s111, %s113
      %p117 = scmp.eq.s32.totalorder %s14, 0
      %p118 = por %p116, %p117
      %p119 = scmp.ne.s32.totalorder %s111, %s113
      %p120 = scmp.eq.s32.totalorder %s19, 1
      %p121 = por %p119, %p120
      %p122 = scmp.ne.s32.totalorder %s113, %s114
      %p123 = scmp.eq.s32.totalorder %s19, 0
      %p124 = por %p122, %p123
      %p125 = scmp.ne.s32.totalorder %s113, %s114
      %p126 = scmp.eq.s32.totalorder %s20, 1
      %p127 = por %p125, %p126
      %p129 = scmp.ne.s32.totalorder %s114, %s128
      %p130 = scmp.eq.s32.totalorder %s20, 0
      %p131 = por %p129, %p130
      %s132 = ssub.s32 %s14, %s21
      %p133 = scmp.eq.s32.totalorder %s132, 0
      %s135 = sadd.s32 %s134, 1
      %s136 = scalar_select %p133, %s134, %s135
      %p139 = pneg %p133
      %p140 = scmp.eq.s32.totalorder %s14, 1
      %p141 = por %p139, %p140
      %p142 = scmp.ne.s32.totalorder %s134, %s137
      %p143 = scmp.eq.s32.totalorder %s14, 0
      %p144 = por %p142, %p143
      %p145 = scmp.ne.s32.totalorder %s134, %s137
      %p146 = scmp.eq.s32.totalorder %s19, 1
      %p147 = por %p145, %p146
      %p148 = scmp.ne.s32.totalorder %s137, %s138
      %p149 = scmp.eq.s32.totalorder %s19, 0
      %p150 = por %p148, %p149
      %p151 = scmp.ne.s32.totalorder %s137, %s138
      %p152 = scmp.eq.s32.totalorder %s20, 1
      %p153 = por %p151, %p152
      %p155 = scmp.ne.s32.totalorder %s138, %s154
      %p156 = scmp.eq.s32.totalorder %s20, 0
      %p157 = por %p155, %p156
      %p158 = scmp.le.s32.totalorder 1, %s14
      %p159 = scmp.lt.s32.totalorder %s14, 3
      %p160 = pnand %p158, %p159
      %p161 = pneg %p160
      // Predicated region
      $region9: #{tpu_custom_call.1} parent=5 // pred_check
        _
      $region10: #{tpu_custom_call.1} parent=5 // pred_check_branch
        %163 = sbr.rel (%p160) target = $region12
      $region11: #{tpu_custom_call.1} parent=5 // pred_region
        %s164 = ssub.s32 %s14, 1
        // Predicated region
        $region13: #{tpu_custom_call.1} parent=11 // pred_check
          %p165 = pneg %p61
        $region14: #{tpu_custom_call.1} parent=11 // pred_check_branch
          %167 = sbr.rel (%p165) target = $region16
        $region15: #{tpu_custom_call.1} parent=11 // pred_region
          _
        $region16: #{tpu_custom_call.1} parent=11 // pred_fallthru
          _
        // Predicated region
        $region17: #{tpu_custom_call.1} parent=11 // pred_check
          %p168 = pneg %p82
        $region18: #{tpu_custom_call.1} parent=11 // pred_check_branch
          %170 = sbr.rel (%p168) target = $region20
        $region19: #{tpu_custom_call.1} parent=11 // pred_region
          _
        $region20: #{tpu_custom_call.1} parent=11 // pred_fallthru
          _
        // Predicated region
        $region21: #{tpu_custom_call.1} parent=11 // pred_check
          %p171 = pneg %p103
        $region22: #{tpu_custom_call.1} parent=11 // pred_check_branch
          %173 = sbr.rel (%p171) target = $region24
        $region23: #{tpu_custom_call.1} parent=11 // pred_region
          _
        $region24: #{tpu_custom_call.1} parent=11 // pred_fallthru
          _
        // Predicated region
        $region25: #{tpu_custom_call.1} parent=11 // pred_check
          %p174 = pneg %p124
        $region26: #{tpu_custom_call.1} parent=11 // pred_check_branch
          %176 = sbr.rel (%p174) target = $region28
        $region27: #{tpu_custom_call.1} parent=11 // pred_region
          _
        $region28: #{tpu_custom_call.1} parent=11 // pred_fallthru
          _
      $region12: #{tpu_custom_call.1} parent=5 // pred_fallthru
        _
      %p177 = scmp.lt.s32.totalorder %s14, 2
      // Predicated region
      $region29: #{tpu_custom_call.1} parent=5 // pred_check
        %p178 = pneg %p177
      $region30: #{tpu_custom_call.1} parent=5 // pred_check_branch
        %180 = sbr.rel (%p178) target = $region32
      $region31: #{tpu_custom_call.1} parent=5 // pred_region
        // Predicated region
        $region33: #{tpu_custom_call.1} parent=31 // pred_check
          %p181 = pneg %p34
        $region34: #{tpu_custom_call.1} parent=31 // pred_check_branch
          %183 = sbr.rel (%p181) target = $region36
        $region35: #{tpu_custom_call.1} parent=31 // pred_region
          %s184 = smul.u32 16, %s14
          %s185 = ssub.s32 25, %s184
          %p186 = scmp.lt.s32.totalorder %s185, 16
          %s187 = scalar_select %p186, %s185, 16
          %s188 = smul.u32 64, %s187
          %p189 = scmp.lt.s32.totalorder %s184, 24
          %s190 = scalar_select %p189, %s184, 24
          %s191 = smul.addr %s190, 4
          %s192 = scalar_lea.vmem %s0, %s191
          %s193 = smul.u32 16, %s14
          %s194 = ssub.s32 25, %s193
          %p195 = scmp.lt.s32.totalorder %s194, 16
          %s196 = scalar_select %p195, %s194, 16
          %s197 = smul.u32 64, %s196
        $region36: #{tpu_custom_call.1} parent=31 // pred_fallthru
          _
      $region32: #{tpu_custom_call.1} parent=5 // pred_fallthru
        _
      %p198 = scmp.le.s32.totalorder 1, %s14
      %p199 = scmp.lt.s32.totalorder %s14, 3
      %p200 = pnand %p198, %p199
      %p201 = pneg %p200
      // Predicated region
      $region37: #{tpu_custom_call.1} parent=5 // pred_check
        _
      $region38: #{tpu_custom_call.1} parent=5 // pred_check_branch
        %203 = sbr.rel (%p200) target = $region40
      $region39: #{tpu_custom_call.1} parent=5 // pred_region
        %s204 = ssub.s32 %s14, 1
        %s205 = smul.u32 16, %s19
        %s206 = ssub.s32 25, %s205
        %p207 = scmp.lt.s32.totalorder %s206, 16
        %s208 = scalar_select %p207, %s206, 16
        %s209 = smul.u32 64, %s208
        %p210 = scmp.lt.s32.totalorder %s205, 24
        %s211 = scalar_select %p210, %s205, 24
        %s212 = smul.addr %s211, 4
        %s213 = scalar_lea.vmem %s0, %s212
        %p214 = pneg %p40
        %p215 = pneg %p37
        %p216 = pneg %p61
        %p217 = pneg %p58
        %p218 = pneg %p82
        %p219 = pneg %p79
        %p220 = pneg %p103
        %p221 = pneg %p100
        %p222 = pneg %p124
        %p223 = pneg %p121
        %p224 = pneg %p150
        %p225 = pneg %p147
        %s226 = sand.u32 %s137, 1
        %s227 = scalar_lea.sflag [#allocation3], %s226
        %s228 = sand.u32 %s137, 1
        %s229 = smul.addr %s228, 32
        %s230 = scalar_lea.vmem [#allocation2], %s229
        %s231 = smul.u32 16, %s19
        %s232 = ssub.s32 25, %s231
        %p233 = scmp.lt.s32.totalorder %s232, 16
        %s234 = scalar_select %p233, %s232, 16
        %s235 = smul.u32 64, %s234
        %p236 = scmp.lt.s32.totalorder %s231, 24
        %s237 = scalar_select %p236, %s231, 24
        %s238 = smul.addr %s237, 4
        %s239 = scalar_lea.vmem %s0, %s238
        %s240 = smul.u32 16, %s19
        %s241 = ssub.s32 25, %s240
        %p242 = scmp.lt.s32.totalorder %s241, 16
        %s243 = scalar_select %p242, %s241, 16
        %s244 = smul.u32 64, %s243
        %s245 = smul.u32 2, %s19
        %v247 = vld [vmem:[%s4] sm:$0xff]
        %v248 = vld [vmem:[%s239] sm:$0xf]
        %v249 = vld [vmem:[%s239 + $0x4] sm:$0xf]
        %v250 = vld [vmem:[%s239 + $0x8] sm:$0xf]
        %v251 = vld [vmem:[%s239 + $0xc] sm:$0xf]
        %v252 = vld [vmem:[%s239 + $0x10] sm:$0xf]
        %v253 = vld [vmem:[%s239 + $0x14] sm:$0xf]
        %v254 = vld [vmem:[%s239 + $0x18] sm:$0xf]
        %v255 = vld [vmem:[%s239 + $0x1c] sm:$0xf]
        %v256 = vld [vmem:[%s239 + $0x20] sm:$0xf]
        %v257 = vld [vmem:[%s239 + $0x24] sm:$0xf]
        %v258 = vld [vmem:[%s239 + $0x28] sm:$0xf]
        %v259 = vld [vmem:[%s239 + $0x2c] sm:$0xf]
        %v260 = vld [vmem:[%s239 + $0x30] sm:$0xf]
        %v261 = vld [vmem:[%s239 + $0x34] sm:$0xf]
        %v262 = vld [vmem:[%s239 + $0x38] sm:$0xf]
        %v263 = vld [vmem:[%s239 + $0x3c] sm:$0xf]
        %v264 = vld [vmem:[%s1] sm:$0xf]
        %v265 = vld [vmem:[%s1 + $0x4] sm:$0xf]
        %v266 = vld [vmem:[%s1 + $0x8] sm:$0xf]
        %v267 = vld [vmem:[%s1 + $0xc] sm:$0xf]
        %v268 = vlaneseq
        %v269 = vshrl.u32 %v268, 7
        %v270 = vsub.s32 0, %v269
        %v271 = vrot.slane %v247, %v270
        %v288 = vunpack.c.l.b16 %v248
        %v289 = vunpack.c.l.b16 %v249
        %v290 = vunpack.c.l.b16 %v250
        %v291 = vunpack.c.l.b16 %v251
        %v292 = vunpack.c.l.b16 %v252
        %v293 = vunpack.c.l.b16 %v253
        %v294 = vunpack.c.l.b16 %v254
        %v295 = vunpack.c.l.b16 %v255
        %v296 = vunpack.c.l.b16 %v256
        %v297 = vunpack.c.l.b16 %v257
        %v298 = vunpack.c.l.b16 %v258
        %v299 = vunpack.c.l.b16 %v259
        %v300 = vunpack.c.l.b16 %v260
        %v301 = vunpack.c.l.b16 %v261
        %v302 = vunpack.c.l.b16 %v262
        %v303 = vunpack.c.l.b16 %v263
        %v304 = vpack.c.b16 %v289, %v288
        %v305 = vpack.c.b16 %v291, %v290
        %v306 = vpack.c.b16 %v293, %v292
        %v307 = vpack.c.b16 %v295, %v294
        %v308 = vpack.c.b16 %v297, %v296
        %v309 = vpack.c.b16 %v299, %v298
        %v310 = vpack.c.b16 %v301, %v300
        %v311 = vpack.c.b16 %v303, %v302
        %v316 = vunpack.c.l.b16 %v264
        %v317 = vunpack.c.l.b16 %v265
        %v318 = vunpack.c.l.b16 %v266
        %v319 = vunpack.c.l.b16 %v267
        %v320 = vpack.c.b16 %v317, %v316
        %v321 = vpack.c.b16 %v319, %v318
        %vm324 = vcmask 261120
        %v326 = vsel %vm324, %v304, 0
        %v329 = vsel %vm324, %v305, 0
        %v332 = vsel %vm324, %v306, 0
        %v335 = vsel %vm324, %v307, 0
        %v338 = vsel %vm324, %v308, 0
        %v341 = vsel %vm324, %v309, 0
        %v344 = vsel %vm324, %v310, 0
        %v347 = vsel %vm324, %v311, 0
        %349 = vmatprep.subr.bf16.mxu0 0
        %350 = vmatpush1.bf16.msra.mxu0 %v320
        %351 = vmatprep.subr.bf16.mxu0 0
        %352 = vmatpush1.bf16.msra.mxu0 %v321
        %353 = vmatprep.subr.bf16.mxu0 0
        %354 = vmatpush1.bf16.msra.mxu0 0
        %355 = vmatprep.subr.bf16.mxu0 0
        %356 = vmatpush1.bf16.msra.mxu0 0
        %357 = vmatprep.subr.bf16.mxu0 0
        %358 = vmatpush1.bf16.msra.mxu0 0
        %359 = vmatprep.subr.bf16.mxu0 0
        %360 = vmatpush1.bf16.msra.mxu0 0
        %361 = vmatprep.subr.bf16.mxu0 0
        %362 = vmatpush1.bf16.msra.mxu0 0
        %363 = vmatprep.subr.bf16.mxu0 0
        %364 = vmatpush1.bf16.msra.mxu0 0
        %365 = vmatprep.subr.bf16.mxu0 0
        %366 = vmatpush1.bf16.msra.mxu0 0
        %367 = vmatprep.subr.bf16.mxu0 0
        %368 = vmatpush1.bf16.msra.mxu0 0
        %369 = vmatprep.subr.bf16.mxu0 0
        %370 = vmatpush1.bf16.msra.mxu0 0
        %371 = vmatprep.subr.bf16.mxu0 0
        %372 = vmatpush1.bf16.msra.mxu0 0
        %373 = vmatprep.subr.bf16.mxu0 0
        %374 = vmatpush1.bf16.msra.mxu0 0
        %375 = vmatprep.subr.bf16.mxu0 0
        %376 = vmatpush1.bf16.msra.mxu0 0
        %377 = vmatprep.subr.bf16.mxu0 0
        %378 = vmatpush1.bf16.msra.mxu0 0
        %379 = vmatprep.subr.bf16.mxu0 0
        %380 = vmatpush1.bf16.msra.mxu0 0
        %381 = vmatprep.mubr.bf16.mxu0 0
        %382 = vmatmul.mubr.bf16.gmra.mrb[0].mxu0 %v326
        %v383 = vpop.f32.mrb[0].mxu0
        %v384 = vadd.f32 %v271, %v383
        %v385 = vpop.f32.mrb[0].mxu0
        %v386 = vpop.f32.mrb[0].mxu0
        %v387 = vadd.f32 %v271, %v386
        %v388 = vpop.f32.mrb[0].mxu0
        %389 = vmatprep.mubr.bf16.mxu0 0
        %390 = vmatmul.mubr.bf16.gmra.mrb[0].mxu0 %v329
        %v391 = vpop.f32.mrb[0].mxu0
        %v392 = vadd.f32 %v271, %v391
        %v393 = vpop.f32.mrb[0].mxu0
        %v394 = vpop.f32.mrb[0].mxu0
        %v395 = vadd.f32 %v271, %v394
        %v396 = vpop.f32.mrb[0].mxu0
        %397 = vmatprep.mubr.bf16.mxu0 0
        %398 = vmatmul.mubr.bf16.gmra.mrb[0].mxu0 %v332
        %v399 = vpop.f32.mrb[0].mxu0
        %v400 = vadd.f32 %v271, %v399
        %v401 = vpop.f32.mrb[0].mxu0
        %v402 = vpop.f32.mrb[0].mxu0
        %v403 = vadd.f32 %v271, %v402
        %v404 = vpop.f32.mrb[0].mxu0
        %405 = vmatprep.mubr.bf16.mxu0 0
        %406 = vmatmul.mubr.bf16.gmra.mrb[0].mxu0 %v335
        %v407 = vpop.f32.mrb[0].mxu0
        %v408 = vadd.f32 %v271, %v407
        %v409 = vpop.f32.mrb[0].mxu0
        %v410 = vpop.f32.mrb[0].mxu0
        %v411 = vadd.f32 %v271, %v410
        %v412 = vpop.f32.mrb[0].mxu0
        %413 = vmatprep.mubr.bf16.mxu0 0
        %414 = vmatmul.mubr.bf16.gmra.mrb[0].mxu0 %v338
        %v415 = vpop.f32.mrb[0].mxu0
        %v416 = vadd.f32 %v271, %v415
        %v417 = vpop.f32.mrb[0].mxu0
        %v418 = vpop.f32.mrb[0].mxu0
        %v419 = vadd.f32 %v271, %v418
        %v420 = vpop.f32.mrb[0].mxu0
        %421 = vmatprep.mubr.bf16.mxu0 0
        %422 = vmatmul.mubr.bf16.gmra.mrb[0].mxu0 %v341
        %v423 = vpop.f32.mrb[0].mxu0
        %v424 = vadd.f32 %v271, %v423
        %v425 = vpop.f32.mrb[0].mxu0
        %v426 = vpop.f32.mrb[0].mxu0
        %v427 = vadd.f32 %v271, %v426
        %v428 = vpop.f32.mrb[0].mxu0
        %429 = vmatprep.mubr.bf16.mxu0 0
        %430 = vmatmul.mubr.bf16.gmra.mrb[0].mxu0 %v344
        %v431 = vpop.f32.mrb[0].mxu0
        %v432 = vadd.f32 %v271, %v431
        %v433 = vpop.f32.mrb[0].mxu0
        %v434 = vpop.f32.mrb[0].mxu0
        %v435 = vadd.f32 %v271, %v434
        %v436 = vpop.f32.mrb[0].mxu0
        %437 = vmatprep.mubr.bf16.mxu0 0
        %438 = vmatmul.mubr.bf16.gmra.mrb[0].mxu0 %v347
        %v439 = vpop.f32.mrb[0].mxu0
        %v440 = vadd.f32 %v271, %v439
        %v441 = vpop.f32.mrb[0].mxu0
        %v442 = vpop.f32.mrb[0].mxu0
        %v443 = vadd.f32 %v271, %v442
        %v444 = vpop.f32.mrb[0].mxu0
        %445 = vdwg.mxu0
        %v446 = vsel %vm324, %v384, 0.0
        %447 = vadd.xlane.f32.xlu0 %v446
        %v448 = vpop.xlane.xlu0 %447
        %v449 = vsel %vm324, %v387, 0.0
        %450 = vadd.xlane.f32.xlu0 %v449
        %v451 = vpop.xlane.xlu0 %450
        %v452 = vsel %vm324, %v392, 0.0
        %453 = vadd.xlane.f32.xlu0 %v452
        %v454 = vpop.xlane.xlu0 %453
        %v455 = vsel %vm324, %v395, 0.0
        %456 = vadd.xlane.f32.xlu0 %v455
        %v457 = vpop.xlane.xlu0 %456
        %v458 = vsel %vm324, %v400, 0.0
        %459 = vadd.xlane.f32.xlu0 %v458
        %v460 = vpop.xlane.xlu0 %459
        %v461 = vsel %vm324, %v403, 0.0
        %462 = vadd.xlane.f32.xlu0 %v461
        %v463 = vpop.xlane.xlu0 %462
        %v464 = vsel %vm324, %v408, 0.0
        %465 = vadd.xlane.f32.xlu0 %v464
        %v466 = vpop.xlane.xlu0 %465
        %v467 = vsel %vm324, %v411, 0.0
        %468 = vadd.xlane.f32.xlu0 %v467
        %v469 = vpop.xlane.xlu0 %468
        %v470 = vsel %vm324, %v416, 0.0
        %471 = vadd.xlane.f32.xlu0 %v470
        %v472 = vpop.xlane.xlu0 %471
        %v473 = vsel %vm324, %v419, 0.0
        %474 = vadd.xlane.f32.xlu0 %v473
        %v475 = vpop.xlane.xlu0 %474
        %v476 = vsel %vm324, %v424, 0.0
        %477 = vadd.xlane.f32.xlu0 %v476
        %v478 = vpop.xlane.xlu0 %477
        %v479 = vsel %vm324, %v427, 0.0
        %480 = vadd.xlane.f32.xlu0 %v479
        %v481 = vpop.xlane.xlu0 %480
        %v482 = vsel %vm324, %v432, 0.0
        %483 = vadd.xlane.f32.xlu0 %v482
        %v484 = vpop.xlane.xlu0 %483
        %v485 = vsel %vm324, %v435, 0.0
        %486 = vadd.xlane.f32.xlu0 %v485
        %v487 = vpop.xlane.xlu0 %486
        %v488 = vsel %vm324, %v440, 0.0
        %489 = vadd.xlane.f32.xlu0 %v488
        %v490 = vpop.xlane.xlu0 %489
        %v491 = vsel %vm324, %v443, 0.0
        %492 = vadd.xlane.f32.xlu0 %v491
        %v493 = vpop.xlane.xlu0 %492
        %v494 = vrcp.pop 32.0
        %v495 = vmul.f32 %v448, %v494
        %v496 = vmul.f32 %v451, %v494
        %v497 = vmul.f32 %v454, %v494
        %v498 = vmul.f32 %v457, %v494
        %v499 = vmul.f32 %v460, %v494
        %v500 = vmul.f32 %v463, %v494
        %v501 = vmul.f32 %v466, %v494
        %v502 = vmul.f32 %v469, %v494
        %v503 = vmul.f32 %v472, %v494
        %v504 = vmul.f32 %v475, %v494
        %v505 = vmul.f32 %v478, %v494
        %v506 = vmul.f32 %v481, %v494
        %v507 = vmul.f32 %v484, %v494
        %v508 = vmul.f32 %v487, %v494
        %v509 = vmul.f32 %v490, %v494
        %v510 = vmul.f32 %v493, %v494
        %v511 = vsub.f32 %v384, %v495
        %v512 = vsub.f32 %v387, %v496
        %v513 = vsub.f32 %v392, %v497
        %v514 = vsub.f32 %v395, %v498
        %v515 = vsub.f32 %v400, %v499
        %v516 = vsub.f32 %v403, %v500
        %v517 = vsub.f32 %v408, %v501
        %v518 = vsub.f32 %v411, %v502
        %v519 = vsub.f32 %v416, %v503
        %v520 = vsub.f32 %v419, %v504
        %v521 = vsub.f32 %v424, %v505
        %v522 = vsub.f32 %v427, %v506
        %v523 = vsub.f32 %v432, %v507
        %v524 = vsub.f32 %v435, %v508
        %v525 = vsub.f32 %v440, %v509
        %v526 = vsub.f32 %v443, %v510
        %v527 = vmul.f32 %v511, %v511
        %v528 = vmul.f32 %v512, %v512
        %v529 = vmul.f32 %v513, %v513
        %v530 = vmul.f32 %v514, %v514
        %v531 = vmul.f32 %v515, %v515
        %v532 = vmul.f32 %v516, %v516
        %v533 = vmul.f32 %v517, %v517
        %v534 = vmul.f32 %v518, %v518
        %v535 = vmul.f32 %v519, %v519
        %v536 = vmul.f32 %v520, %v520
        %v537 = vmul.f32 %v521, %v521
        %v538 = vmul.f32 %v522, %v522
        %v539 = vmul.f32 %v523, %v523
        %v540 = vmul.f32 %v524, %v524
        %v541 = vmul.f32 %v525, %v525
        %v542 = vmul.f32 %v526, %v526
        %v543 = vsel %vm324, %v527, 0.0
        %544 = vadd.xlane.f32.xlu0 %v543
        %v545 = vpop.xlane.xlu0 %544
        %v546 = vsel %vm324, %v528, 0.0
        %547 = vadd.xlane.f32.xlu0 %v546
        %v548 = vpop.xlane.xlu0 %547
        %v549 = vsel %vm324, %v529, 0.0
        %550 = vadd.xlane.f32.xlu0 %v549
        %v551 = vpop.xlane.xlu0 %550
        %v552 = vsel %vm324, %v530, 0.0
        %553 = vadd.xlane.f32.xlu0 %v552
        %v554 = vpop.xlane.xlu0 %553
        %v555 = vsel %vm324, %v531, 0.0
        %556 = vadd.xlane.f32.xlu0 %v555
        %v557 = vpop.xlane.xlu0 %556
        %v558 = vsel %vm324, %v532, 0.0
        %559 = vadd.xlane.f32.xlu0 %v558
        %v560 = vpop.xlane.xlu0 %559
        %v561 = vsel %vm324, %v533, 0.0
        %562 = vadd.xlane.f32.xlu0 %v561
        %v563 = vpop.xlane.xlu0 %562
        %v564 = vsel %vm324, %v534, 0.0
        %565 = vadd.xlane.f32.xlu0 %v564
        %v566 = vpop.xlane.xlu0 %565
        %v567 = vsel %vm324, %v535, 0.0
        %568 = vadd.xlane.f32.xlu0 %v567
        %v569 = vpop.xlane.xlu0 %568
        %v570 = vsel %vm324, %v536, 0.0
        %571 = vadd.xlane.f32.xlu0 %v570
        %v572 = vpop.xlane.xlu0 %571
        %v573 = vsel %vm324, %v537, 0.0
        %574 = vadd.xlane.f32.xlu0 %v573
        %v575 = vpop.xlane.xlu0 %574
        %v576 = vsel %vm324, %v538, 0.0
        %577 = vadd.xlane.f32.xlu0 %v576
        %v578 = vpop.xlane.xlu0 %577
        %v579 = vsel %vm324, %v539, 0.0
        %580 = vadd.xlane.f32.xlu0 %v579
        %v581 = vpop.xlane.xlu0 %580
        %v582 = vsel %vm324, %v540, 0.0
        %583 = vadd.xlane.f32.xlu0 %v582
        %v584 = vpop.xlane.xlu0 %583
        %v585 = vsel %vm324, %v541, 0.0
        %586 = vadd.xlane.f32.xlu0 %v585
        %v587 = vpop.xlane.xlu0 %586
        %v588 = vsel %vm324, %v542, 0.0
        %589 = vadd.xlane.f32.xlu0 %v588
        %v590 = vpop.xlane.xlu0 %589
        %v591 = vmul.f32 %v545, %v494
        %v592 = vmul.f32 %v548, %v494
        %v593 = vmul.f32 %v551, %v494
        %v594 = vmul.f32 %v554, %v494
        %v595 = vmul.f32 %v557, %v494
        %v596 = vmul.f32 %v560, %v494
        %v597 = vmul.f32 %v563, %v494
        %v598 = vmul.f32 %v566, %v494
        %v599 = vmul.f32 %v569, %v494
        %v600 = vmul.f32 %v572, %v494
        %v601 = vmul.f32 %v575, %v494
        %v602 = vmul.f32 %v578, %v494
        %v603 = vmul.f32 %v581, %v494
        %v604 = vmul.f32 %v584, %v494
        %v605 = vmul.f32 %v587, %v494
        %v606 = vmul.f32 %v590, %v494
        %v607 = vadd.f32 %v591, 1e-05
        %v608 = vadd.f32 %v592, 1e-05
        %v609 = vadd.f32 %v593, 1e-05
        %v610 = vadd.f32 %v594, 1e-05
        %v611 = vadd.f32 %v595, 1e-05
        %v612 = vadd.f32 %v596, 1e-05
        %v613 = vadd.f32 %v597, 1e-05
        %v614 = vadd.f32 %v598, 1e-05
        %v615 = vadd.f32 %v599, 1e-05
        %v616 = vadd.f32 %v600, 1e-05
        %v617 = vadd.f32 %v601, 1e-05
        %v618 = vadd.f32 %v602, 1e-05
        %v619 = vadd.f32 %v603, 1e-05
        %v620 = vadd.f32 %v604, 1e-05
        %v621 = vadd.f32 %v605, 1e-05
        %v622 = vadd.f32 %v606, 1e-05
        %v623 = vrsqrt.pop %v607
        %v624 = vrsqrt.pop %v608
        %v625 = vrsqrt.pop %v609
        %v626 = vrsqrt.pop %v610
        %v627 = vrsqrt.pop %v611
        %v628 = vrsqrt.pop %v612
        %v629 = vrsqrt.pop %v613
        %v630 = vrsqrt.pop %v614
        %v631 = vrsqrt.pop %v615
        %v632 = vrsqrt.pop %v616
        %v633 = vrsqrt.pop %v617
        %v634 = vrsqrt.pop %v618
        %v635 = vrsqrt.pop %v619
        %v636 = vrsqrt.pop %v620
        %v637 = vrsqrt.pop %v621
        %v638 = vrsqrt.pop %v622
        %v639 = vmul.f32 %v511, %v623
        %v640 = vmul.f32 %v512, %v624
        %v641 = vmul.f32 %v513, %v625
        %v642 = vmul.f32 %v514, %v626
        %v643 = vmul.f32 %v515, %v627
        %v644 = vmul.f32 %v516, %v628
        %v645 = vmul.f32 %v517, %v629
        %v646 = vmul.f32 %v518, %v630
        %v647 = vmul.f32 %v519, %v631
        %v648 = vmul.f32 %v520, %v632
        %v649 = vmul.f32 %v521, %v633
        %v650 = vmul.f32 %v522, %v634
        %v651 = vmul.f32 %v523, %v635
        %v652 = vmul.f32 %v524, %v636
        %v653 = vmul.f32 %v525, %v637
        %v654 = vmul.f32 %v526, %v638
        %v655 = vlaneseq
        %v656 = vshrl.u32 %v655, 7
        %v657 = vsub.s32 1, %v656
        %v658 = vrot.slane %v247, %v657
        %v659 = vmul.f32 %v639, %v658
        %v660 = vmul.f32 %v640, %v658
        %v661 = vmul.f32 %v641, %v658
        %v662 = vmul.f32 %v642, %v658
        %v663 = vmul.f32 %v643, %v658
        %v664 = vmul.f32 %v644, %v658
        %v665 = vmul.f32 %v645, %v658
        %v666 = vmul.f32 %v646, %v658
        %v667 = vmul.f32 %v647, %v658
        %v668 = vmul.f32 %v648, %v658
        %v669 = vmul.f32 %v649, %v658
        %v670 = vmul.f32 %v650, %v658
        %v671 = vmul.f32 %v651, %v658
        %v672 = vmul.f32 %v652, %v658
        %v673 = vmul.f32 %v653, %v658
        %v674 = vmul.f32 %v654, %v658
        %v675 = vlaneseq
        %v676 = vshrl.u32 %v675, 7
        %v677 = vsub.s32 2, %v676
        %v678 = vrot.slane %v247, %v677
        %v679 = vadd.f32 %v659, %v678
        %v680 = vadd.f32 %v660, %v678
        %v681 = vadd.f32 %v661, %v678
        %v682 = vadd.f32 %v662, %v678
        %v683 = vadd.f32 %v663, %v678
        %v684 = vadd.f32 %v664, %v678
        %v685 = vadd.f32 %v665, %v678
        %v686 = vadd.f32 %v666, %v678
        %v687 = vadd.f32 %v667, %v678
        %v688 = vadd.f32 %v668, %v678
        %v689 = vadd.f32 %v669, %v678
        %v690 = vadd.f32 %v670, %v678
        %v691 = vadd.f32 %v671, %v678
        %v692 = vadd.f32 %v672, %v678
        %v693 = vadd.f32 %v673, %v678
        %v694 = vadd.f32 %v674, %v678
        %v695 = vmul.f32 %v679, 0.5
        %v696 = vmul.f32 %v680, 0.5
        %v697 = vmul.f32 %v681, 0.5
        %v698 = vmul.f32 %v682, 0.5
        %v699 = vmul.f32 %v683, 0.5
        %v700 = vmul.f32 %v684, 0.5
        %v701 = vmul.f32 %v685, 0.5
        %v702 = vmul.f32 %v686, 0.5
        %v703 = vmul.f32 %v687, 0.5
        %v704 = vmul.f32 %v688, 0.5
        %v705 = vmul.f32 %v689, 0.5
        %v706 = vmul.f32 %v690, 0.5
        %v707 = vmul.f32 %v691, 0.5
        %v708 = vmul.f32 %v692, 0.5
        %v709 = vmul.f32 %v693, 0.5
        %v710 = vmul.f32 %v694, 0.5
        %v711 = vmul.f32 %v679, 0.70710677
        %v712 = vmul.f32 %v680, 0.70710677
        %v713 = vmul.f32 %v681, 0.70710677
        %v714 = vmul.f32 %v682, 0.70710677
        %v715 = vmul.f32 %v683, 0.70710677
        %v716 = vmul.f32 %v684, 0.70710677
        %v717 = vmul.f32 %v685, 0.70710677
        %v718 = vmul.f32 %v686, 0.70710677
        %v719 = vmul.f32 %v687, 0.70710677
        %v720 = vmul.f32 %v688, 0.70710677
        %v721 = vmul.f32 %v689, 0.70710677
        %v722 = vmul.f32 %v690, 0.70710677
        %v723 = vmul.f32 %v691, 0.70710677
        %v724 = vmul.f32 %v692, 0.70710677
        %v725 = vmul.f32 %v693, 0.70710677
        %v726 = vmul.f32 %v694, 0.70710677
        %v727 = verf.f32.pop %v711
        %v728 = verf.f32.pop %v712
        %v729 = verf.f32.pop %v713
        %v730 = verf.f32.pop %v714
        %v731 = verf.f32.pop %v715
        %v732 = verf.f32.pop %v716
        %v733 = verf.f32.pop %v717
        %v734 = verf.f32.pop %v718
        %v735 = verf.f32.pop %v719
        %v736 = verf.f32.pop %v720
        %v737 = verf.f32.pop %v721
        %v738 = verf.f32.pop %v722
        %v739 = verf.f32.pop %v723
        %v740 = verf.f32.pop %v724
        %v741 = verf.f32.pop %v725
        %v742 = verf.f32.pop %v726
        %v743 = vadd.f32 %v727, 1.0
        %v744 = vadd.f32 %v728, 1.0
        %v745 = vadd.f32 %v729, 1.0
        %v746 = vadd.f32 %v730, 1.0
        %v747 = vadd.f32 %v731, 1.0
        %v748 = vadd.f32 %v732, 1.0
        %v749 = vadd.f32 %v733, 1.0
        %v750 = vadd.f32 %v734, 1.0
        %v751 = vadd.f32 %v735, 1.0
        %v752 = vadd.f32 %v736, 1.0
        %v753 = vadd.f32 %v737, 1.0
        %v754 = vadd.f32 %v738, 1.0
        %v755 = vadd.f32 %v739, 1.0
        %v756 = vadd.f32 %v740, 1.0
        %v757 = vadd.f32 %v741, 1.0
        %v758 = vadd.f32 %v742, 1.0
        %v759 = vmul.f32 %v695, %v743
        %v760 = vmul.f32 %v696, %v744
        %v761 = vmul.f32 %v697, %v745
        %v762 = vmul.f32 %v698, %v746
        %v763 = vmul.f32 %v699, %v747
        %v764 = vmul.f32 %v700, %v748
        %v765 = vmul.f32 %v701, %v749
        %v766 = vmul.f32 %v702, %v750
        %v767 = vmul.f32 %v703, %v751
        %v768 = vmul.f32 %v704, %v752
        %v769 = vmul.f32 %v705, %v753
        %v770 = vmul.f32 %v706, %v754
        %v771 = vmul.f32 %v707, %v755
        %v772 = vmul.f32 %v708, %v756
        %v773 = vmul.f32 %v709, %v757
        %v774 = vmul.f32 %v710, %v758
        %v775 = vpack.c.bf16 %v760, %v759
        %v776 = vpack.c.bf16 %v762, %v761
        %v777 = vpack.c.bf16 %v764, %v763
        %v778 = vpack.c.bf16 %v766, %v765
        %v779 = vpack.c.bf16 %v768, %v767
        %v780 = vpack.c.bf16 %v770, %v769
        %v781 = vpack.c.bf16 %v772, %v771
        %v782 = vpack.c.bf16 %v774, %v773
        %v783 = vld [vmem:[%s2] sm:$0xf]
        %v784 = vld [vmem:[%s2 + $0x4] sm:$0xf]
        %v785 = vld [vmem:[%s2 + $0x8] sm:$0xf]
        %v786 = vld [vmem:[%s2 + $0xc] sm:$0xf]
        %v787 = vlaneseq
        %v788 = vshrl.u32 %v787, 7
        %v789 = vsub.s32 3, %v788
        %v790 = vrot.slane %v247, %v789
        %v795 = vunpack.c.l.b16 %v783
        %v796 = vunpack.c.l.b16 %v784
        %v797 = vunpack.c.l.b16 %v785
        %v798 = vunpack.c.l.b16 %v786
        %v799 = vpack.c.b16 %v796, %v795
        %v800 = vpack.c.b16 %v798, %v797
        %v804 = vsel %vm324, %v775, 0
        %v807 = vsel %vm324, %v776, 0
        %v810 = vsel %vm324, %v777, 0
        %v813 = vsel %vm324, %v778, 0
        %v816 = vsel %vm324, %v779, 0
        %v819 = vsel %vm324, %v780, 0
        %v822 = vsel %vm324, %v781, 0
        %v825 = vsel %vm324, %v782, 0
        %827 = vmatprep.subr.bf16.mxu0 0
        %828 = vmatpush1.bf16.msra.mxu0 %v799
        %829 = vmatprep.subr.bf16.mxu0 0
        %830 = vmatpush1.bf16.msra.mxu0 %v800
        %831 = vmatprep.subr.bf16.mxu0 0
        %832 = vmatpush1.bf16.msra.mxu0 0
        %833 = vmatprep.subr.bf16.mxu0 0
        %834 = vmatpush1.bf16.msra.mxu0 0
        %835 = vmatprep.subr.bf16.mxu0 0
        %836 = vmatpush1.bf16.msra.mxu0 0
        %837 = vmatprep.subr.bf16.mxu0 0
        %838 = vmatpush1.bf16.msra.mxu0 0
        %839 = vmatprep.subr.bf16.mxu0 0
        %840 = vmatpush1.bf16.msra.mxu0 0
        %841 = vmatprep.subr.bf16.mxu0 0
        %842 = vmatpush1.bf16.msra.mxu0 0
        %843 = vmatprep.subr.bf16.mxu0 0
        %844 = vmatpush1.bf16.msra.mxu0 0
        %845 = vmatprep.subr.bf16.mxu0 0
        %846 = vmatpush1.bf16.msra.mxu0 0
        %847 = vmatprep.subr.bf16.mxu0 0
        %848 = vmatpush1.bf16.msra.mxu0 0
        %849 = vmatprep.subr.bf16.mxu0 0
        %850 = vmatpush1.bf16.msra.mxu0 0
        %851 = vmatprep.subr.bf16.mxu0 0
        %852 = vmatpush1.bf16.msra.mxu0 0
        %853 = vmatprep.subr.bf16.mxu0 0
        %854 = vmatpush1.bf16.msra.mxu0 0
        %855 = vmatprep.subr.bf16.mxu0 0
        %856 = vmatpush1.bf16.msra.mxu0 0
        %857 = vmatprep.subr.bf16.mxu0 0
        %858 = vmatpush1.bf16.msra.mxu0 0
        %859 = vmatprep.mubr.bf16.mxu0 0
        %860 = vmatmul.mubr.bf16.gmra.mrb[0].mxu0 %v804
        %v861 = vpop.f32.mrb[0].mxu0
        %v862 = vadd.f32 %v790, %v861
        %v863 = vpop.f32.mrb[0].mxu0
        %v864 = vpop.f32.mrb[0].mxu0
        %v865 = vadd.f32 %v790, %v864
        %v866 = vpop.f32.mrb[0].mxu0
        %867 = vmatprep.mubr.bf16.mxu0 0
        %868 = vmatmul.mubr.bf16.gmra.mrb[0].mxu0 %v807
        %v869 = vpop.f32.mrb[0].mxu0
        %v870 = vadd.f32 %v790, %v869
        %v871 = vpop.f32.mrb[0].mxu0
        %v872 = vpop.f32.mrb[0].mxu0
        %v873 = vadd.f32 %v790, %v872
        %v874 = vpop.f32.mrb[0].mxu0
        %875 = vmatprep.mubr.bf16.mxu0 0
        %876 = vmatmul.mubr.bf16.gmra.mrb[0].mxu0 %v810
        %v877 = vpop.f32.mrb[0].mxu0
        %v878 = vadd.f32 %v790, %v877
        %v879 = vpop.f32.mrb[0].mxu0
        %v880 = vpop.f32.mrb[0].mxu0
        %v881 = vadd.f32 %v790, %v880
        %v882 = vpop.f32.mrb[0].mxu0
        %883 = vmatprep.mubr.bf16.mxu0 0
        %884 = vmatmul.mubr.bf16.gmra.mrb[0].mxu0 %v813
        %v885 = vpop.f32.mrb[0].mxu0
        %v886 = vadd.f32 %v790, %v885
        %v887 = vpop.f32.mrb[0].mxu0
        %v888 = vpop.f32.mrb[0].mxu0
        %v889 = vadd.f32 %v790, %v888
        %v890 = vpop.f32.mrb[0].mxu0
        %891 = vmatprep.mubr.bf16.mxu0 0
        %892 = vmatmul.mubr.bf16.gmra.mrb[0].mxu0 %v816
        %v893 = vpop.f32.mrb[0].mxu0
        %v894 = vadd.f32 %v790, %v893
        %v895 = vpop.f32.mrb[0].mxu0
        %v896 = vpop.f32.mrb[0].mxu0
        %v897 = vadd.f32 %v790, %v896
        %v898 = vpop.f32.mrb[0].mxu0
        %899 = vmatprep.mubr.bf16.mxu0 0
        %900 = vmatmul.mubr.bf16.gmra.mrb[0].mxu0 %v819
        %v901 = vpop.f32.mrb[0].mxu0
        %v902 = vadd.f32 %v790, %v901
        %v903 = vpop.f32.mrb[0].mxu0
        %v904 = vpop.f32.mrb[0].mxu0
        %v905 = vadd.f32 %v790, %v904
        %v906 = vpop.f32.mrb[0].mxu0
        %907 = vmatprep.mubr.bf16.mxu0 0
        %908 = vmatmul.mubr.bf16.gmra.mrb[0].mxu0 %v822
        %v909 = vpop.f32.mrb[0].mxu0
        %v910 = vadd.f32 %v790, %v909
        %v911 = vpop.f32.mrb[0].mxu0
        %v912 = vpop.f32.mrb[0].mxu0
        %v913 = vadd.f32 %v790, %v912
        %v914 = vpop.f32.mrb[0].mxu0
        %915 = vmatprep.mubr.bf16.mxu0 0
        %916 = vmatmul.mubr.bf16.gmra.mrb[0].mxu0 %v825
        %v917 = vpop.f32.mrb[0].mxu0
        %v918 = vadd.f32 %v790, %v917
        %v919 = vpop.f32.mrb[0].mxu0
        %v920 = vpop.f32.mrb[0].mxu0
        %v921 = vadd.f32 %v790, %v920
        %v922 = vpop.f32.mrb[0].mxu0
        %923 = vdwg.mxu0
        %v924 = vsel %vm324, %v862, 0.0
        %925 = vadd.xlane.f32.xlu0 %v924
        %v926 = vpop.xlane.xlu0 %925
        %v927 = vsel %vm324, %v865, 0.0
        %928 = vadd.xlane.f32.xlu0 %v927
        %v929 = vpop.xlane.xlu0 %928
        %v930 = vsel %vm324, %v870, 0.0
        %931 = vadd.xlane.f32.xlu0 %v930
        %v932 = vpop.xlane.xlu0 %931
        %v933 = vsel %vm324, %v873, 0.0
        %934 = vadd.xlane.f32.xlu0 %v933
        %v935 = vpop.xlane.xlu0 %934
        %v936 = vsel %vm324, %v878, 0.0
        %937 = vadd.xlane.f32.xlu0 %v936
        %v938 = vpop.xlane.xlu0 %937
        %v939 = vsel %vm324, %v881, 0.0
        %940 = vadd.xlane.f32.xlu0 %v939
        %v941 = vpop.xlane.xlu0 %940
        %v942 = vsel %vm324, %v886, 0.0
        %943 = vadd.xlane.f32.xlu0 %v942
        %v944 = vpop.xlane.xlu0 %943
        %v945 = vsel %vm324, %v889, 0.0
        %946 = vadd.xlane.f32.xlu0 %v945
        %v947 = vpop.xlane.xlu0 %946
        %v948 = vsel %vm324, %v894, 0.0
        %949 = vadd.xlane.f32.xlu0 %v948
        %v950 = vpop.xlane.xlu0 %949
        %v951 = vsel %vm324, %v897, 0.0
        %952 = vadd.xlane.f32.xlu0 %v951
        %v953 = vpop.xlane.xlu0 %952
        %v954 = vsel %vm324, %v902, 0.0
        %955 = vadd.xlane.f32.xlu0 %v954
        %v956 = vpop.xlane.xlu0 %955
        %v957 = vsel %vm324, %v905, 0.0
        %958 = vadd.xlane.f32.xlu0 %v957
        %v959 = vpop.xlane.xlu0 %958
        %v960 = vsel %vm324, %v910, 0.0
        %961 = vadd.xlane.f32.xlu0 %v960
        %v962 = vpop.xlane.xlu0 %961
        %v963 = vsel %vm324, %v913, 0.0
        %964 = vadd.xlane.f32.xlu0 %v963
        %v965 = vpop.xlane.xlu0 %964
        %v966 = vsel %vm324, %v918, 0.0
        %967 = vadd.xlane.f32.xlu0 %v966
        %v968 = vpop.xlane.xlu0 %967
        %v969 = vsel %vm324, %v921, 0.0
        %970 = vadd.xlane.f32.xlu0 %v969
        %v971 = vpop.xlane.xlu0 %970
        %v972 = vmul.f32 %v926, %v494
        %v973 = vmul.f32 %v929, %v494
        %v974 = vmul.f32 %v932, %v494
        %v975 = vmul.f32 %v935, %v494
        %v976 = vmul.f32 %v938, %v494
        %v977 = vmul.f32 %v941, %v494
        %v978 = vmul.f32 %v944, %v494
        %v979 = vmul.f32 %v947, %v494
        %v980 = vmul.f32 %v950, %v494
        %v981 = vmul.f32 %v953, %v494
        %v982 = vmul.f32 %v956, %v494
        %v983 = vmul.f32 %v959, %v494
        %v984 = vmul.f32 %v962, %v494
        %v985 = vmul.f32 %v965, %v494
        %v986 = vmul.f32 %v968, %v494
        %v987 = vmul.f32 %v971, %v494
        %v988 = vsub.f32 %v862, %v972
        %v989 = vsub.f32 %v865, %v973
        %v990 = vsub.f32 %v870, %v974
        %v991 = vsub.f32 %v873, %v975
        %v992 = vsub.f32 %v878, %v976
        %v993 = vsub.f32 %v881, %v977
        %v994 = vsub.f32 %v886, %v978
        %v995 = vsub.f32 %v889, %v979
        %v996 = vsub.f32 %v894, %v980
        %v997 = vsub.f32 %v897, %v981
        %v998 = vsub.f32 %v902, %v982
        %v999 = vsub.f32 %v905, %v983
        %v1000 = vsub.f32 %v910, %v984
        %v1001 = vsub.f32 %v913, %v985
        %v1002 = vsub.f32 %v918, %v986
        %v1003 = vsub.f32 %v921, %v987
        %v1004 = vmul.f32 %v988, %v988
        %v1005 = vmul.f32 %v989, %v989
        %v1006 = vmul.f32 %v990, %v990
        %v1007 = vmul.f32 %v991, %v991
        %v1008 = vmul.f32 %v992, %v992
        %v1009 = vmul.f32 %v993, %v993
        %v1010 = vmul.f32 %v994, %v994
        %v1011 = vmul.f32 %v995, %v995
        %v1012 = vmul.f32 %v996, %v996
        %v1013 = vmul.f32 %v997, %v997
        %v1014 = vmul.f32 %v998, %v998
        %v1015 = vmul.f32 %v999, %v999
        %v1016 = vmul.f32 %v1000, %v1000
        %v1017 = vmul.f32 %v1001, %v1001
        %v1018 = vmul.f32 %v1002, %v1002
        %v1019 = vmul.f32 %v1003, %v1003
        %v1020 = vsel %vm324, %v1004, 0.0
        %1021 = vadd.xlane.f32.xlu0 %v1020
        %v1022 = vpop.xlane.xlu0 %1021
        %v1023 = vsel %vm324, %v1005, 0.0
        %1024 = vadd.xlane.f32.xlu0 %v1023
        %v1025 = vpop.xlane.xlu0 %1024
        %v1026 = vsel %vm324, %v1006, 0.0
        %1027 = vadd.xlane.f32.xlu0 %v1026
        %v1028 = vpop.xlane.xlu0 %1027
        %v1029 = vsel %vm324, %v1007, 0.0
        %1030 = vadd.xlane.f32.xlu0 %v1029
        %v1031 = vpop.xlane.xlu0 %1030
        %v1032 = vsel %vm324, %v1008, 0.0
        %1033 = vadd.xlane.f32.xlu0 %v1032
        %v1034 = vpop.xlane.xlu0 %1033
        %v1035 = vsel %vm324, %v1009, 0.0
        %1036 = vadd.xlane.f32.xlu0 %v1035
        %v1037 = vpop.xlane.xlu0 %1036
        %v1038 = vsel %vm324, %v1010, 0.0
        %1039 = vadd.xlane.f32.xlu0 %v1038
        %v1040 = vpop.xlane.xlu0 %1039
        %v1041 = vsel %vm324, %v1011, 0.0
        %1042 = vadd.xlane.f32.xlu0 %v1041
        %v1043 = vpop.xlane.xlu0 %1042
        %v1044 = vsel %vm324, %v1012, 0.0
        %1045 = vadd.xlane.f32.xlu0 %v1044
        %v1046 = vpop.xlane.xlu0 %1045
        %v1047 = vsel %vm324, %v1013, 0.0
        %1048 = vadd.xlane.f32.xlu0 %v1047
        %v1049 = vpop.xlane.xlu0 %1048
        %v1050 = vsel %vm324, %v1014, 0.0
        %1051 = vadd.xlane.f32.xlu0 %v1050
        %v1052 = vpop.xlane.xlu0 %1051
        %v1053 = vsel %vm324, %v1015, 0.0
        %1054 = vadd.xlane.f32.xlu0 %v1053
        %v1055 = vpop.xlane.xlu0 %1054
        %v1056 = vsel %vm324, %v1016, 0.0
        %1057 = vadd.xlane.f32.xlu0 %v1056
        %v1058 = vpop.xlane.xlu0 %1057
        %v1059 = vsel %vm324, %v1017, 0.0
        %1060 = vadd.xlane.f32.xlu0 %v1059
        %v1061 = vpop.xlane.xlu0 %1060
        %v1062 = vsel %vm324, %v1018, 0.0
        %1063 = vadd.xlane.f32.xlu0 %v1062
        %v1064 = vpop.xlane.xlu0 %1063
        %v1065 = vsel %vm324, %v1019, 0.0
        %1066 = vadd.xlane.f32.xlu0 %v1065
        %v1067 = vpop.xlane.xlu0 %1066
        %v1068 = vmul.f32 %v1022, %v494
        %v1069 = vmul.f32 %v1025, %v494
        %v1070 = vmul.f32 %v1028, %v494
        %v1071 = vmul.f32 %v1031, %v494
        %v1072 = vmul.f32 %v1034, %v494
        %v1073 = vmul.f32 %v1037, %v494
        %v1074 = vmul.f32 %v1040, %v494
        %v1075 = vmul.f32 %v1043, %v494
        %v1076 = vmul.f32 %v1046, %v494
        %v1077 = vmul.f32 %v1049, %v494
        %v1078 = vmul.f32 %v1052, %v494
        %v1079 = vmul.f32 %v1055, %v494
        %v1080 = vmul.f32 %v1058, %v494
        %v1081 = vmul.f32 %v1061, %v494
        %v1082 = vmul.f32 %v1064, %v494
        %v1083 = vmul.f32 %v1067, %v494
        %v1084 = vadd.f32 %v1068, 1e-05
        %v1085 = vadd.f32 %v1069, 1e-05
        %v1086 = vadd.f32 %v1070, 1e-05
        %v1087 = vadd.f32 %v1071, 1e-05
        %v1088 = vadd.f32 %v1072, 1e-05
        %v1089 = vadd.f32 %v1073, 1e-05
        %v1090 = vadd.f32 %v1074, 1e-05
        %v1091 = vadd.f32 %v1075, 1e-05
        %v1092 = vadd.f32 %v1076, 1e-05
        %v1093 = vadd.f32 %v1077, 1e-05
        %v1094 = vadd.f32 %v1078, 1e-05
        %v1095 = vadd.f32 %v1079, 1e-05
        %v1096 = vadd.f32 %v1080, 1e-05
        %v1097 = vadd.f32 %v1081, 1e-05
        %v1098 = vadd.f32 %v1082, 1e-05
        %v1099 = vadd.f32 %v1083, 1e-05
        %v1100 = vrsqrt.pop %v1084
        %v1101 = vrsqrt.pop %v1085
        %v1102 = vrsqrt.pop %v1086
        %v1103 = vrsqrt.pop %v1087
        %v1104 = vrsqrt.pop %v1088
        %v1105 = vrsqrt.pop %v1089
        %v1106 = vrsqrt.pop %v1090
        %v1107 = vrsqrt.pop %v1091
        %v1108 = vrsqrt.pop %v1092
        %v1109 = vrsqrt.pop %v1093
        %v1110 = vrsqrt.pop %v1094
        %v1111 = vrsqrt.pop %v1095
        %v1112 = vrsqrt.pop %v1096
        %v1113 = vrsqrt.pop %v1097
        %v1114 = vrsqrt.pop %v1098
        %v1115 = vrsqrt.pop %v1099
        %v1116 = vmul.f32 %v988, %v1100
        %v1117 = vmul.f32 %v989, %v1101
        %v1118 = vmul.f32 %v990, %v1102
        %v1119 = vmul.f32 %v991, %v1103
        %v1120 = vmul.f32 %v992, %v1104
        %v1121 = vmul.f32 %v993, %v1105
        %v1122 = vmul.f32 %v994, %v1106
        %v1123 = vmul.f32 %v995, %v1107
        %v1124 = vmul.f32 %v996, %v1108
        %v1125 = vmul.f32 %v997, %v1109
        %v1126 = vmul.f32 %v998, %v1110
        %v1127 = vmul.f32 %v999, %v1111
        %v1128 = vmul.f32 %v1000, %v1112
        %v1129 = vmul.f32 %v1001, %v1113
        %v1130 = vmul.f32 %v1002, %v1114
        %v1131 = vmul.f32 %v1003, %v1115
        %v1132 = vlaneseq
        %v1133 = vshrl.u32 %v1132, 7
        %v1134 = vsub.s32 4, %v1133
        %v1135 = vrot.slane %v247, %v1134
        %v1136 = vmul.f32 %v1116, %v1135
        %v1137 = vmul.f32 %v1117, %v1135
        %v1138 = vmul.f32 %v1118, %v1135
        %v1139 = vmul.f32 %v1119, %v1135
        %v1140 = vmul.f32 %v1120, %v1135
        %v1141 = vmul.f32 %v1121, %v1135
        %v1142 = vmul.f32 %v1122, %v1135
        %v1143 = vmul.f32 %v1123, %v1135
        %v1144 = vmul.f32 %v1124, %v1135
        %v1145 = vmul.f32 %v1125, %v1135
        %v1146 = vmul.f32 %v1126, %v1135
        %v1147 = vmul.f32 %v1127, %v1135
        %v1148 = vmul.f32 %v1128, %v1135
        %v1149 = vmul.f32 %v1129, %v1135
        %v1150 = vmul.f32 %v1130, %v1135
        %v1151 = vmul.f32 %v1131, %v1135
        %v1152 = vlaneseq
        %v1153 = vshrl.u32 %v1152, 7
        %v1154 = vsub.s32 5, %v1153
        %v1155 = vrot.slane %v247, %v1154
        %v1156 = vadd.f32 %v1136, %v1155
        %v1157 = vadd.f32 %v1137, %v1155
        %v1158 = vadd.f32 %v1138, %v1155
        %v1159 = vadd.f32 %v1139, %v1155
        %v1160 = vadd.f32 %v1140, %v1155
        %v1161 = vadd.f32 %v1141, %v1155
        %v1162 = vadd.f32 %v1142, %v1155
        %v1163 = vadd.f32 %v1143, %v1155
        %v1164 = vadd.f32 %v1144, %v1155
        %v1165 = vadd.f32 %v1145, %v1155
        %v1166 = vadd.f32 %v1146, %v1155
        %v1167 = vadd.f32 %v1147, %v1155
        %v1168 = vadd.f32 %v1148, %v1155
        %v1169 = vadd.f32 %v1149, %v1155
        %v1170 = vadd.f32 %v1150, %v1155
        %v1171 = vadd.f32 %v1151, %v1155
        %v1172 = vmul.f32 %v1156, 0.5
        %v1173 = vmul.f32 %v1157, 0.5
        %v1174 = vmul.f32 %v1158, 0.5
        %v1175 = vmul.f32 %v1159, 0.5
        %v1176 = vmul.f32 %v1160, 0.5
        %v1177 = vmul.f32 %v1161, 0.5
        %v1178 = vmul.f32 %v1162, 0.5
        %v1179 = vmul.f32 %v1163, 0.5
        %v1180 = vmul.f32 %v1164, 0.5
        %v1181 = vmul.f32 %v1165, 0.5
        %v1182 = vmul.f32 %v1166, 0.5
        %v1183 = vmul.f32 %v1167, 0.5
        %v1184 = vmul.f32 %v1168, 0.5
        %v1185 = vmul.f32 %v1169, 0.5
        %v1186 = vmul.f32 %v1170, 0.5
        %v1187 = vmul.f32 %v1171, 0.5
        %v1188 = vmul.f32 %v1156, 0.70710677
        %v1189 = vmul.f32 %v1157, 0.70710677
        %v1190 = vmul.f32 %v1158, 0.70710677
        %v1191 = vmul.f32 %v1159, 0.70710677
        %v1192 = vmul.f32 %v1160, 0.70710677
        %v1193 = vmul.f32 %v1161, 0.70710677
        %v1194 = vmul.f32 %v1162, 0.70710677
        %v1195 = vmul.f32 %v1163, 0.70710677
        %v1196 = vmul.f32 %v1164, 0.70710677
        %v1197 = vmul.f32 %v1165, 0.70710677
        %v1198 = vmul.f32 %v1166, 0.70710677
        %v1199 = vmul.f32 %v1167, 0.70710677
        %v1200 = vmul.f32 %v1168, 0.70710677
        %v1201 = vmul.f32 %v1169, 0.70710677
        %v1202 = vmul.f32 %v1170, 0.70710677
        %v1203 = vmul.f32 %v1171, 0.70710677
        %v1204 = verf.f32.pop %v1188
        %v1205 = verf.f32.pop %v1189
        %v1206 = verf.f32.pop %v1190
        %v1207 = verf.f32.pop %v1191
        %v1208 = verf.f32.pop %v1192
        %v1209 = verf.f32.pop %v1193
        %v1210 = verf.f32.pop %v1194
        %v1211 = verf.f32.pop %v1195
        %v1212 = verf.f32.pop %v1196
        %v1213 = verf.f32.pop %v1197
        %v1214 = verf.f32.pop %v1198
        %v1215 = verf.f32.pop %v1199
        %v1216 = verf.f32.pop %v1200
        %v1217 = verf.f32.pop %v1201
        %v1218 = verf.f32.pop %v1202
        %v1219 = verf.f32.pop %v1203
        %v1220 = vadd.f32 %v1204, 1.0
        %v1221 = vadd.f32 %v1205, 1.0
        %v1222 = vadd.f32 %v1206, 1.0
        %v1223 = vadd.f32 %v1207, 1.0
        %v1224 = vadd.f32 %v1208, 1.0
        %v1225 = vadd.f32 %v1209, 1.0
        %v1226 = vadd.f32 %v1210, 1.0
        %v1227 = vadd.f32 %v1211, 1.0
        %v1228 = vadd.f32 %v1212, 1.0
        %v1229 = vadd.f32 %v1213, 1.0
        %v1230 = vadd.f32 %v1214, 1.0
        %v1231 = vadd.f32 %v1215, 1.0
        %v1232 = vadd.f32 %v1216, 1.0
        %v1233 = vadd.f32 %v1217, 1.0
        %v1234 = vadd.f32 %v1218, 1.0
        %v1235 = vadd.f32 %v1219, 1.0
        %v1236 = vmul.f32 %v1172, %v1220
        %v1237 = vmul.f32 %v1173, %v1221
        %v1238 = vmul.f32 %v1174, %v1222
        %v1239 = vmul.f32 %v1175, %v1223
        %v1240 = vmul.f32 %v1176, %v1224
        %v1241 = vmul.f32 %v1177, %v1225
        %v1242 = vmul.f32 %v1178, %v1226
        %v1243 = vmul.f32 %v1179, %v1227
        %v1244 = vmul.f32 %v1180, %v1228
        %v1245 = vmul.f32 %v1181, %v1229
        %v1246 = vmul.f32 %v1182, %v1230
        %v1247 = vmul.f32 %v1183, %v1231
        %v1248 = vmul.f32 %v1184, %v1232
        %v1249 = vmul.f32 %v1185, %v1233
        %v1250 = vmul.f32 %v1186, %v1234
        %v1251 = vmul.f32 %v1187, %v1235
        %v1252 = vpack.c.bf16 %v1237, %v1236
        %v1253 = vpack.c.bf16 %v1239, %v1238
        %v1254 = vpack.c.bf16 %v1241, %v1240
        %v1255 = vpack.c.bf16 %v1243, %v1242
        %v1256 = vpack.c.bf16 %v1245, %v1244
        %v1257 = vpack.c.bf16 %v1247, %v1246
        %v1258 = vpack.c.bf16 %v1249, %v1248
        %v1259 = vpack.c.bf16 %v1251, %v1250
        %v1260 = vld [vmem:[%s3] sm:$0xf]
        %v1261 = vld [vmem:[%s3 + $0x4] sm:$0xf]
        %v1262 = vld [vmem:[%s3 + $0x8] sm:$0xf]
        %v1263 = vld [vmem:[%s3 + $0xc] sm:$0xf]
        %v1264 = vlaneseq
        %v1265 = vshrl.u32 %v1264, 7
        %v1266 = vsub.s32 6, %v1265
        %v1267 = vrot.slane %v247, %v1266
        %v1272 = vunpack.c.l.b16 %v1260
        %v1273 = vunpack.c.l.b16 %v1261
        %v1274 = vunpack.c.l.b16 %v1262
        %v1275 = vunpack.c.l.b16 %v1263
        %v1276 = vpack.c.b16 %v1273, %v1272
        %v1277 = vpack.c.b16 %v1275, %v1274
        %v1281 = vsel %vm324, %v1252, 0
        %v1284 = vsel %vm324, %v1253, 0
        %v1287 = vsel %vm324, %v1254, 0
        %v1290 = vsel %vm324, %v1255, 0
        %v1293 = vsel %vm324, %v1256, 0
        %v1296 = vsel %vm324, %v1257, 0
        %v1299 = vsel %vm324, %v1258, 0
        %v1302 = vsel %vm324, %v1259, 0
        %1304 = vmatprep.subr.bf16.mxu0 0
        %1305 = vmatpush1.bf16.msra.mxu0 %v1276
        %1306 = vmatprep.subr.bf16.mxu0 0
        %1307 = vmatpush1.bf16.msra.mxu0 %v1277
        %1308 = vmatprep.subr.bf16.mxu0 0
        %1309 = vmatpush1.bf16.msra.mxu0 0
        %1310 = vmatprep.subr.bf16.mxu0 0
        %1311 = vmatpush1.bf16.msra.mxu0 0
        %1312 = vmatprep.subr.bf16.mxu0 0
        %1313 = vmatpush1.bf16.msra.mxu0 0
        %1314 = vmatprep.subr.bf16.mxu0 0
        %1315 = vmatpush1.bf16.msra.mxu0 0
        %1316 = vmatprep.subr.bf16.mxu0 0
        %1317 = vmatpush1.bf16.msra.mxu0 0
        %1318 = vmatprep.subr.bf16.mxu0 0
        %1319 = vmatpush1.bf16.msra.mxu0 0
        %1320 = vmatprep.subr.bf16.mxu0 0
        %1321 = vmatpush1.bf16.msra.mxu0 0
        %1322 = vmatprep.subr.bf16.mxu0 0
        %1323 = vmatpush1.bf16.msra.mxu0 0
        %1324 = vmatprep.subr.bf16.mxu0 0
        %1325 = vmatpush1.bf16.msra.mxu0 0
        %1326 = vmatprep.subr.bf16.mxu0 0
        %1327 = vmatpush1.bf16.msra.mxu0 0
        %1328 = vmatprep.subr.bf16.mxu0 0
        %1329 = vmatpush1.bf16.msra.mxu0 0
        %1330 = vmatprep.subr.bf16.mxu0 0
        %1331 = vmatpush1.bf16.msra.mxu0 0
        %1332 = vmatprep.subr.bf16.mxu0 0
        %1333 = vmatpush1.bf16.msra.mxu0 0
        %1334 = vmatprep.subr.bf16.mxu0 0
        %1335 = vmatpush1.bf16.msra.mxu0 0
        %1336 = vmatprep.mubr.bf16.mxu0 0
        %1337 = vmatmul.mubr.bf16.gmra.mrb[0].mxu0 %v1281
        %v1338 = vpop.f32.mrb[0].mxu0
        %v1339 = vadd.f32 %v1267, %v1338
        %v1340 = vpop.f32.mrb[0].mxu0
        %v1341 = vpop.f32.mrb[0].mxu0
        %v1342 = vadd.f32 %v1267, %v1341
        %v1343 = vpop.f32.mrb[0].mxu0
        %1344 = vmatprep.mubr.bf16.mxu0 0
        %1345 = vmatmul.mubr.bf16.gmra.mrb[0].mxu0 %v1284
        %v1346 = vpop.f32.mrb[0].mxu0
        %v1347 = vadd.f32 %v1267, %v1346
        %v1348 = vpop.f32.mrb[0].mxu0
        %v1349 = vpop.f32.mrb[0].mxu0
        %v1350 = vadd.f32 %v1267, %v1349
        %v1351 = vpop.f32.mrb[0].mxu0
        %1352 = vmatprep.mubr.bf16.mxu0 0
        %1353 = vmatmul.mubr.bf16.gmra.mrb[0].mxu0 %v1287
        %v1354 = vpop.f32.mrb[0].mxu0
        %v1355 = vadd.f32 %v1267, %v1354
        %v1356 = vpop.f32.mrb[0].mxu0
        %v1357 = vpop.f32.mrb[0].mxu0
        %v1358 = vadd.f32 %v1267, %v1357
        %v1359 = vpop.f32.mrb[0].mxu0
        %1360 = vmatprep.mubr.bf16.mxu0 0
        %1361 = vmatmul.mubr.bf16.gmra.mrb[0].mxu0 %v1290
        %v1362 = vpop.f32.mrb[0].mxu0
        %v1363 = vadd.f32 %v1267, %v1362
        %v1364 = vpop.f32.mrb[0].mxu0
        %v1365 = vpop.f32.mrb[0].mxu0
        %v1366 = vadd.f32 %v1267, %v1365
        %v1367 = vpop.f32.mrb[0].mxu0
        %1368 = vmatprep.mubr.bf16.mxu0 0
        %1369 = vmatmul.mubr.bf16.gmra.mrb[0].mxu0 %v1293
        %v1370 = vpop.f32.mrb[0].mxu0
        %v1371 = vadd.f32 %v1267, %v1370
        %v1372 = vpop.f32.mrb[0].mxu0
        %v1373 = vpop.f32.mrb[0].mxu0
        %v1374 = vadd.f32 %v1267, %v1373
        %v1375 = vpop.f32.mrb[0].mxu0
        %1376 = vmatprep.mubr.bf16.mxu0 0
        %1377 = vmatmul.mubr.bf16.gmra.mrb[0].mxu0 %v1296
        %v1378 = vpop.f32.mrb[0].mxu0
        %v1379 = vadd.f32 %v1267, %v1378
        %v1380 = vpop.f32.mrb[0].mxu0
        %v1381 = vpop.f32.mrb[0].mxu0
        %v1382 = vadd.f32 %v1267, %v1381
        %v1383 = vpop.f32.mrb[0].mxu0
        %1384 = vmatprep.mubr.bf16.mxu0 0
        %1385 = vmatmul.mubr.bf16.gmra.mrb[0].mxu0 %v1299
        %v1386 = vpop.f32.mrb[0].mxu0
        %v1387 = vadd.f32 %v1267, %v1386
        %v1388 = vpop.f32.mrb[0].mxu0
        %v1389 = vpop.f32.mrb[0].mxu0
        %v1390 = vadd.f32 %v1267, %v1389
        %v1391 = vpop.f32.mrb[0].mxu0
        %1392 = vmatprep.mubr.bf16.mxu0 0
        %1393 = vmatmul.mubr.bf16.gmra.mrb[0].mxu0 %v1302
        %v1394 = vpop.f32.mrb[0].mxu0
        %v1395 = vadd.f32 %v1267, %v1394
        %v1396 = vpop.f32.mrb[0].mxu0
        %v1397 = vpop.f32.mrb[0].mxu0
        %v1398 = vadd.f32 %v1267, %v1397
        %v1399 = vpop.f32.mrb[0].mxu0
        %1400 = vdwg.mxu0
        %1403 = vrot.lane.b32.xlu0 %v1347, 32
        %v1404 = vpop.permute.xlu0 %1403
        %1405 = vrot.lane.b32.xlu0 %v1350, 32
        %v1406 = vpop.permute.xlu0 %1405
        %1411 = vrot.lane.b32.xlu0 %v1355, 64
        %v1412 = vpop.permute.xlu0 %1411
        %1413 = vrot.lane.b32.xlu0 %v1358, 64
        %v1414 = vpop.permute.xlu0 %1413
        %1419 = vrot.lane.b32.xlu0 %v1363, 96
        %v1420 = vpop.permute.xlu0 %1419
        %1421 = vrot.lane.b32.xlu0 %v1366, 96
        %v1422 = vpop.permute.xlu0 %1421
        %1427 = vrot.lane.b32.xlu0 %v1379, 32
        %v1428 = vpop.permute.xlu0 %1427
        %1429 = vrot.lane.b32.xlu0 %v1382, 32
        %v1430 = vpop.permute.xlu0 %1429
        %1435 = vrot.lane.b32.xlu0 %v1387, 64
        %v1436 = vpop.permute.xlu0 %1435
        %1437 = vrot.lane.b32.xlu0 %v1390, 64
        %v1438 = vpop.permute.xlu0 %1437
        %1443 = vrot.lane.b32.xlu0 %v1395, 96
        %v1444 = vpop.permute.xlu0 %1443
        %1445 = vrot.lane.b32.xlu0 %v1398, 96
        %v1446 = vpop.permute.xlu0 %1445
        %v1449 = vsel %vm324, %v1339, %v1404
        %v1450 = vsel %vm324, %v1342, %v1406
        %vm1451 = vcmask 523264
        %v1452 = vsel %vm1451, %v1449, %v1412
        %v1453 = vsel %vm1451, %v1450, %v1414
        %vm1454 = vcmask 785408
        %v1455 = vsel %vm1454, %v1452, %v1420
        %v1456 = vsel %vm1454, %v1453, %v1422
        %v1457 = vsel %vm324, %v1371, %v1428
        %v1458 = vsel %vm324, %v1374, %v1430
        %v1459 = vsel %vm1451, %v1457, %v1436
        %v1460 = vsel %vm1451, %v1458, %v1438
        %v1461 = vsel %vm1454, %v1459, %v1444
        %v1462 = vsel %vm1454, %v1460, %v1446
        %v1463 = vlaneseq
        %v1464 = vand.u32 %v1463, 127
        %v1465 = vadd.s32 %v1464, 128
        %vm1466 = vcmp.lt.s32.totalorder %v1464, 0
        %v1467 = vsub.s32 0, %v1464
        %v1468 = vsel %vm1466, %v1467, %v1464
        %v1469 = vshrl.u32 %v1468, 5
        %v1470 = vand.u32 %v1468, 31
        %v1471 = vsub.s32 0, %v1470
        %v1472 = vsel %vm1466, %v1471, %v1470
        %vm1473 = vcmp.lt.s32.totalorder %v1465, 0
        %v1474 = vsub.s32 0, %v1465
        %v1475 = vsel %vm1473, %v1474, %v1465
        %v1476 = vshrl.u32 %v1475, 5
        %v1477 = vand.u32 %v1475, 31
        %v1478 = vsub.s32 0, %v1477
        %v1479 = vsel %vm1473, %v1478, %v1477
        %vm1480 = vcmp.ne.s32.totalorder %v1472, 0
        %vm1481 = vcmp.ne.s32.totalorder %v1479, 0
        %vm1482 = vcmp.lt.s32.totalorder %v1472, 0
        %vm1483 = vcmp.lt.s32.totalorder %v1479, 0
        %vm1484 = vmand %vm1482, %vm1480
        %vm1485 = vmand %vm1483, %vm1481
        %v1486 = vadd.s32 %v1472, 32
        %v1487 = vadd.s32 %v1479, 32
        %v1488 = vsel %vm1484, %v1486, %v1472
        %v1489 = vsel %vm1485, %v1487, %v1479
        %vm1490 = vcmp.lt.s32.totalorder %v1488, 16
        %vm1491 = vcmp.lt.s32.totalorder %v1489, 16
        %v1492 = vsel %vm1490, 0.0, %v1455
        %v1493 = vsel %vm1491, 0.0, %v1461
        %v1494 = vsel %vm1490, 0.0, %v1456
        %v1495 = vsel %vm1491, 0.0, %v1462
        %v1496 = vmul.f32 %v1492, 1.442695
        %v1497 = vpow.pop %v1496
        %v1498 = vmul.f32 %v1493, 1.442695
        %v1499 = vpow.pop %v1498
        %v1500 = vmul.f32 %v1494, 1.442695
        %v1501 = vpow.pop %v1500
        %v1502 = vmul.f32 %v1495, 1.442695
        %v1503 = vpow.pop %v1502
        %v1504 = vsel %vm1490, %v1455, %v1497
        %v1505 = vsel %vm1491, %v1461, %v1499
        %v1506 = vsel %vm1490, %v1456, %v1501
        %v1507 = vsel %vm1491, %v1462, %v1503
        %1508 = vst [vmem:[%s230] sm:$0xff] %v1504
        %1509 = vst [vmem:[%s230 + $0x8] sm:$0xff] %v1505
        %1510 = vst [vmem:[%s230 + $0x10] sm:$0xff] %v1506
        %1511 = vst [vmem:[%s230 + $0x18] sm:$0xff] %v1507
        %s1512 = sand.u32 %s137, 1
        %s1513 = scalar_lea.sflag [#allocation3], %s1512
        %s1514 = sand.u32 %s137, 1
        %s1515 = smul.addr %s1514, 32
        %s1516 = scalar_lea.vmem [#allocation2], %s1515
        // Predicated region
        $region41: #{tpu_custom_call.1} parent=39 // pred_check
          %p1517 = pneg %p147
        $region42: #{tpu_custom_call.1} parent=39 // pred_check_branch
          %1519 = sbr.rel (%p1517) target = $region44
        $region43: #{tpu_custom_call.1} parent=39 // pred_region
          %s1520 = smul.u32 2, %s19
          %s1522 = ssub.s32 512, 512
          %1523 = vsyncadd %s1513, %s1522
          %s1524 = smul.addr %s1520, 2
          %s1525 = smul.addr %s1524, 128
          %s1526 = scalar_lea.hbm %s5, %s1525
          %s1527 = sshll.u32 %s1516, 4
          %s1528 = int_to_ptr.vmem [resolvable:$true] %s1527
          %1533 = dma.vmem_to_hbm [thread:$0]  %s1528, 512, %s1526, %s1513, 256, 256, 16
        $region44: #{tpu_custom_call.1} parent=39 // pred_fallthru
          _
      $region40: #{tpu_custom_call.1} parent=5 // pred_fallthru
        _
      %p1534 = scmp.le.s32.totalorder 2, %s14
      // Predicated region
      $region45: #{tpu_custom_call.1} parent=5 // pred_check
        %p1535 = pneg %p1534
      $region46: #{tpu_custom_call.1} parent=5 // pred_check_branch
        %1537 = sbr.rel (%p1535) target = $region48
      $region47: #{tpu_custom_call.1} parent=5 // pred_region
        %s1538 = ssub.s32 %s14, 2
        // Predicated region
        $region49: #{tpu_custom_call.1} parent=47 // pred_check
          %p1539 = pneg %p153
        $region50: #{tpu_custom_call.1} parent=47 // pred_check_branch
          %1541 = sbr.rel (%p1539) target = $region52
        $region51: #{tpu_custom_call.1} parent=47 // pred_region
          %s1542 = sand.u32 %s138, 1
          %s1543 = scalar_lea.sflag [#allocation3], %s1542
          %s1544 = sand.u32 %s138, 1
          %s1545 = smul.addr %s1544, 32
          %s1546 = scalar_lea.vmem [#allocation2], %s1545
          %1547 = dma.done %s1543, 512
        $region52: #{tpu_custom_call.1} parent=47 // pred_fallthru
          _
      $region48: #{tpu_custom_call.1} parent=5 // pred_fallthru
        _
    $region6: #{tpu_custom_call.1} parent=1 // loop_footer
      %s18 = sadd.s32 1, %s14
    $region7: #{tpu_custom_call.1} parent=1 // loop_footer_branch
      %13 = sbr.rel target = $region3
    $region8: #{tpu_custom_call.1} parent=1 // loop_exit
      _
    %1548 = vsyncpa [#allocation3], 1
    %s1549 = scalar_lea.sflag [#allocation3], 1
    %1550 = vsyncpa %s1549, 1

</llo_original>
